<compile_context>
chip_gen: v6e
topology: v6e:2x2x1
jax: 0.10.0
libtpu: 0.0.40
codegen_flags: <defaults>
</compile_context>

<pallas_src>
import jax
import jax.numpy as jnp
import numpy as np
from jax.experimental import pallas as pl
from jax.experimental.pallas import tpu as pltpu

VMEM = pltpu.MemorySpace.VMEM


# ------------------------------ fused kernel ------------------------------- #

def _lenet_fused_kernel(x_ref, wc_ref, wf_ref, out_ref):
    f32, bf16 = jnp.float32, jnp.bfloat16
    n_img = (x_ref.shape[0] - 8) // 32          # 32 padded rows per image (+8 tail)
    r1, r2, r3 = 32 * n_img, 16 * n_img, 8 * n_img

    x = x_ref[...]                                                  # (32N+8, 28) bf16

    # ---- conv1 (1->6, 5x5): 5 row-shifted matmuls; out lane = parity*128+oc*12+ow//2
    y1 = jnp.dot(x[0:r1, :], wc_ref[0:28, :], preferred_element_type=f32)
    for kh in range(1, 5):
        y1 = y1 + jnp.dot(x[kh:kh + r1, :], wc_ref[32 * kh:32 * kh + 28, :],
                          preferred_element_type=f32)
    y1 = jnp.maximum(y1 + wc_ref[160:161, :].astype(f32), 0.0)      # (32N, 256)

    # ---- 2x2 max-pool #1: width = max of the two aligned 128-lane halves,
    #      height = reshape(rows, 2, 128) + max over the pair axis ----
    pw1 = jnp.maximum(y1[:, 0:128], y1[:, 128:256])                 # (32N, 128)
    p1 = jnp.max(pw1.reshape(r2, 2, 128), axis=1)                   # (16N, 128) f32
    p1 = jnp.concatenate([p1, jnp.zeros((8, 128), f32)], axis=0).astype(bf16)

    # ---- conv2 (6->16, 5x5): 5 row-shifted matmuls; out lane = parity*128+oc*4+ow//2
    y2 = jnp.dot(p1[0:r2, :], wc_ref[168:296, :], preferred_element_type=f32)
    for kh in range(1, 5):
        o = 168 + 128 * kh
        y2 = y2 + jnp.dot(p1[kh:kh + r2, :], wc_ref[o:o + 128, :],
                          preferred_element_type=f32)
    y2 = jnp.maximum(y2 + wc_ref[808:809, :].astype(f32), 0.0)      # (16N, 256)

    # ---- 2x2 max-pool #2 ----
    pw2 = jnp.maximum(y2[:, 0:128], y2[:, 128:256])                 # (16N, 128)
    p2 = jnp.max(pw2.reshape(r3, 2, 128), axis=1)                   # (8N, 128) f32
    p2 = jnp.concatenate([p2, jnp.zeros((8, 128), f32)], axis=0).astype(bf16)

    biases = wf_ref[768:771, :].astype(f32)                         # fc1/fc2/fc3 bias

    # ---- fc1: NCHW flatten folded into 4 row-shifted (pooled-height) weight blocks
    h1 = jnp.dot(p2[0:r3, :], wf_ref[0:128, :], preferred_element_type=f32)
    for i2 in range(1, 4):
        h1 = h1 + jnp.dot(p2[i2:i2 + r3, :], wf_ref[128 * i2:128 * i2 + 128, :],
                          preferred_element_type=f32)
    h1 = jnp.maximum(h1 + biases[0:1, :], 0.0)                      # (8N, 128)

    # ---- fc2, fc3 (row-wise; only rows 8n are valid and are sliced outside) ----
    h2 = jnp.dot(h1.astype(bf16), wf_ref[512:640, :], preferred_element_type=f32)
    h2 = jnp.maximum(h2 + biases[1:2, :], 0.0)                      # (8N, 128)

    out = jnp.dot(h2.astype(bf16), wf_ref[640:768, :], preferred_element_type=f32)
    out_ref[...] = out + biases[2:3, :]                             # (8N, 128)


# --------------------------- parameter packing ----------------------------- #

def pack_params(params, dtype=jnp.bfloat16):
    """One-time host-side repack of PyTorch-layout params into two VMEM slabs."""
    w1 = np.asarray(params["conv1_w"], np.float32)   # (6, 1, 5, 5)  OIHW
    b1 = np.asarray(params["conv1_b"], np.float32)
    w2 = np.asarray(params["conv2_w"], np.float32)   # (16, 6, 5, 5)
    b2 = np.asarray(params["conv2_b"], np.float32)
    f1w = np.asarray(params["fc1_w"], np.float32)    # (120, 256), cols = (c, h, w)
    f1b = np.asarray(params["fc1_b"], np.float32)
    f2w = np.asarray(params["fc2_w"], np.float32)    # (84, 120)
    f2b = np.asarray(params["fc2_b"], np.float32)
    f3w = np.asarray(params["fc3_w"], np.float32)    # (10, 84)
    f3b = np.asarray(params["fc3_b"], np.float32)

    # Output-lane layouts: width parity selects the 128-lane half so the kernel's
    # width pool is max(lower_half, upper_half) with zero lane shuffles.
    def lane1(oc, ow):       # conv1: 6 ch x 24 widths -> 72 lanes per half
        return (ow % 2) * 128 + oc * 12 + ow // 2

    def lane2(oc, ow):       # conv2: 16 ch x 8 widths -> 64 lanes per half
        return (ow % 2) * 128 + oc * 4 + ow // 2

    # Conv slab (816 x 256):
    #   rows [32*kh, 32*kh+28)        conv1 band for kernel-row kh (K = input width 28)
    #   row  160                      conv1 bias (broadcast over output lanes)
    #   rows [168+128*kh, +128)       conv2 band for kernel-row kh (K = 6*12 pooled lanes)
    #   row  808                      conv2 bias
    wc = np.zeros((816, 256), np.float32)
    for kh in range(5):
        for kw in range(5):
            for ow in range(24):
                for oc in range(6):
                    wc[32 * kh + ow + kw, lane1(oc, ow)] += w1[oc, 0, kh, kw]
    for ow in range(24):
        for oc in range(6):
            wc[160, lane1(oc, ow)] = b1[oc]
    for kh in range(5):
        for kw in range(5):
            for ic in range(6):
                for ow in range(8):
                    for oc in range(16):
                        wc[168 + 128 * kh + ic * 12 + ow + kw,
                           lane2(oc, ow)] += w2[oc, ic, kh, kw]
    for ow in range(8):
        for oc in range(16):
            wc[808, lane2(oc, ow)] = b2[oc]

    # FC slab (776 x 128):
    #   rows [128*i2, +128)  fc1 block for pooled height i2 (PyTorch (c,h,w) flatten
    #                        folded in; input lane = c*4 + w, output cols 0..119)
    #   rows [512, 640)      fc2 (pre-transposed, zero-padded to 128x128)
    #   rows [640, 768)      fc3 (pre-transposed, zero-padded to 128x128)
    #   rows 768/769/770     fc1 / fc2 / fc3 biases (lane-padded to 128)
    wf = np.zeros((776, 128), np.float32)
    for i2 in range(4):
        for c in range(16):
            for j2 in range(4):
                wf[128 * i2 + c * 4 + j2, 0:120] = f1w[:, c * 16 + i2 * 4 + j2]
    wf[512:632, 0:84] = f2w.T
    wf[640:724, 0:10] = f3w.T
    wf[768, 0:120] = f1b
    wf[769, 0:84] = f2b
    wf[770, 0:10] = f3b

    return {"wc": jnp.asarray(wc, dtype), "wf": jnp.asarray(wf, dtype)}


# ------------------------------ forward pass ------------------------------- #

@jax.jit
def convnet_forward(packed, x_nchw):
    """x_nchw: (N, 1, 28, 28) float32 -> logits (N, 10)."""
    n = x_nchw.shape[0]
    x = x_nchw.reshape(n, 28, 28)
    x = jnp.pad(x, ((0, 0), (0, 4), (0, 0)))                    # 32 rows per image
    x2d = jnp.pad(x.reshape(n * 32, 28), ((0, 8), (0, 0)))      # + trailing pad rows
    x2d = x2d.astype(jnp.bfloat16)                              # MXU operand dtype

    out = pl.pallas_call(
        _lenet_fused_kernel,
        out_shape=jax.ShapeDtypeStruct((8 * n, 128), jnp.float32),
        in_specs=[pl.BlockSpec(memory_space=VMEM)] * 3,
        out_specs=pl.BlockSpec(memory_space=VMEM),
    )(x2d, packed["wc"], packed["wf"])

    # One valid fc row per image (row 8n); valid logits are the first 10 lanes.
    return out.reshape(n, 8, 128)[:, 0, :10]


# ------------------------------ init & reference --------------------------- #

def init_params(key):
    ks = jax.random.split(key, 10)

    def nrm(k, shape, scale):
        return jax.random.normal(k, shape, jnp.float32) * scale

    return {
        "conv1_w": nrm(ks[0], (6, 1, 5, 5), 0.2),
        "conv1_b": nrm(ks[1], (6,), 0.1),
        "conv2_w": nrm(ks[2], (16, 6, 5, 5), 0.1),
        "conv2_b": nrm(ks[3], (16,), 0.1),
        "fc1_w": nrm(ks[4], (120, 16 * 4 * 4), 0.05),
        "fc1_b": nrm(ks[5], (120,), 0.05),
        "fc2_w": nrm(ks[6], (84, 120), 0.05),
        "fc2_b": nrm(ks[7], (84,), 0.05),
        "fc3_w": nrm(ks[8], (10, 84), 0.05),
        "fc3_b": nrm(ks[9], (10,), 0.05),
    }


def _ref_forward(params, x_nchw):
    """Pure-JAX f32 reference mirroring the PyTorch forward."""
    def conv_block(x, w, b):
        y = jax.lax.conv_general_dilated(
            x, w, (1, 1), "VALID", dimension_numbers=("NCHW", "OIHW", "NCHW"))
        y = jnp.maximum(y + b.reshape(1, -1, 1, 1), 0.0)
        n, c, h, wd = y.shape
        return y.reshape(n, c, h // 2, 2, wd // 2, 2).max(axis=(3, 5))

    x = conv_block(x_nchw, params["conv1_w"], params["conv1_b"])
    x = conv_block(x, params["conv2_w"], params["conv2_b"])
    x = x.reshape(x.shape[0], -1)
    x = jnp.maximum(x @ params["fc1_w"].T + params["fc1_b"], 0.0)
    x = jnp.maximum(x @ params["fc2_w"].T + params["fc2_b"], 0.0)
    return x @ params["fc3_w"].T + params["fc3_b"]


if __name__ == "__main__":
    key = jax.random.PRNGKey(0)
    k_params, k_x = jax.random.split(key)
    params = init_params(k_params)
    packed = pack_params(params)          # one-time host-side weight repack (2 slabs)

    # PyTorch-convention NCHW input: batch=2, 1 channel, 28x28 (LeNet geometry).
    x = jax.random.normal(k_x, (2, 1, 28, 28), jnp.float32)

    out = jax.block_until_ready(convnet_forward(packed, x))

    assert out.shape == (2, 10), out.shape
    assert bool(jnp.all(jnp.isfinite(out)))

    ref = _ref_forward(params, x)
    # Matmul operands are intentionally bfloat16 (f32 accumulation), so compare
    # against the f32 reference with a correspondingly relaxed tolerance.
    assert jnp.allclose(out, ref, rtol=5e-2, atol=5e-2), (out, ref)

    print("KERNEL_OK")
</pallas_src>

<mosaic_0001>
module attributes {stable_mosaic.version = 11 : i64} {
  func.func @_lenet_fused_kernel(%arg0: memref<72x28xbf16, #tpu.memory_space<vmem>>, %arg1: memref<816x256xbf16, #tpu.memory_space<vmem>>, %arg2: memref<776x128xbf16, #tpu.memory_space<vmem>>, %arg3: memref<16x128xf32, #tpu.memory_space<vmem>>) attributes {dimension_semantics = [], scalar_prefetch = 0 : i64, scratch_operands = 0 : i64, tpu.core_type = #tpu.core_type<tc>} {
    %c0 = arith.constant 0 : index
    %c0_0 = arith.constant 0 : index
    %0 = vector.load %arg0[%c0, %c0_0] : memref<72x28xbf16, #tpu.memory_space<vmem>>, vector<72x28xbf16>
    %1 = vector.extract_strided_slice %0 {offsets = [0, 0], sizes = [64, 28], strides = [1, 1]} : vector<72x28xbf16> to vector<64x28xbf16>
    %c0_1 = arith.constant 0 : index
    %c0_2 = arith.constant 0 : index
    %2 = vector.load %arg1[%c0_1, %c0_2] : memref<816x256xbf16, #tpu.memory_space<vmem>>, vector<28x256xbf16>
    %cst = arith.constant dense<0.000000e+00> : vector<64x256xf32>
    %3 = tpu.matmul %1, %2, %cst {dimension_numbers = #tpu.dot_dimension_numbers<[1], [0], [0], [1], [0, 0, 1, 1], [], []>} : vector<64x28xbf16>, vector<28x256xbf16>, vector<64x256xf32> -> vector<64x256xf32>
    %4 = vector.extract_strided_slice %0 {offsets = [1, 0], sizes = [64, 28], strides = [1, 1]} : vector<72x28xbf16> to vector<64x28xbf16>
    %c32 = arith.constant 32 : index
    %c0_3 = arith.constant 0 : index
    %5 = vector.load %arg1[%c32, %c0_3] : memref<816x256xbf16, #tpu.memory_space<vmem>>, vector<28x256xbf16>
    %cst_4 = arith.constant dense<0.000000e+00> : vector<64x256xf32>
    %6 = tpu.matmul %4, %5, %cst_4 {dimension_numbers = #tpu.dot_dimension_numbers<[1], [0], [0], [1], [0, 0, 1, 1], [], []>} : vector<64x28xbf16>, vector<28x256xbf16>, vector<64x256xf32> -> vector<64x256xf32>
    %7 = arith.addf %3, %6 : vector<64x256xf32>
    %8 = vector.extract_strided_slice %0 {offsets = [2, 0], sizes = [64, 28], strides = [1, 1]} : vector<72x28xbf16> to vector<64x28xbf16>
    %c64 = arith.constant 64 : index
    %c0_5 = arith.constant 0 : index
    %9 = vector.load %arg1[%c64, %c0_5] : memref<816x256xbf16, #tpu.memory_space<vmem>>, vector<28x256xbf16>
    %cst_6 = arith.constant dense<0.000000e+00> : vector<64x256xf32>
    %10 = tpu.matmul %8, %9, %cst_6 {dimension_numbers = #tpu.dot_dimension_numbers<[1], [0], [0], [1], [0, 0, 1, 1], [], []>} : vector<64x28xbf16>, vector<28x256xbf16>, vector<64x256xf32> -> vector<64x256xf32>
    %11 = arith.addf %7, %10 : vector<64x256xf32>
    %12 = vector.extract_strided_slice %0 {offsets = [3, 0], sizes = [64, 28], strides = [1, 1]} : vector<72x28xbf16> to vector<64x28xbf16>
    %c96 = arith.constant 96 : index
    %c0_7 = arith.constant 0 : index
    %13 = vector.load %arg1[%c96, %c0_7] : memref<816x256xbf16, #tpu.memory_space<vmem>>, vector<28x256xbf16>
    %cst_8 = arith.constant dense<0.000000e+00> : vector<64x256xf32>
    %14 = tpu.matmul %12, %13, %cst_8 {dimension_numbers = #tpu.dot_dimension_numbers<[1], [0], [0], [1], [0, 0, 1, 1], [], []>} : vector<64x28xbf16>, vector<28x256xbf16>, vector<64x256xf32> -> vector<64x256xf32>
    %15 = arith.addf %11, %14 : vector<64x256xf32>
    %16 = vector.extract_strided_slice %0 {offsets = [4, 0], sizes = [64, 28], strides = [1, 1]} : vector<72x28xbf16> to vector<64x28xbf16>
    %c128 = arith.constant 128 : index
    %c0_9 = arith.constant 0 : index
    %17 = vector.load %arg1[%c128, %c0_9] : memref<816x256xbf16, #tpu.memory_space<vmem>>, vector<28x256xbf16>
    %cst_10 = arith.constant dense<0.000000e+00> : vector<64x256xf32>
    %18 = tpu.matmul %16, %17, %cst_10 {dimension_numbers = #tpu.dot_dimension_numbers<[1], [0], [0], [1], [0, 0, 1, 1], [], []>} : vector<64x28xbf16>, vector<28x256xbf16>, vector<64x256xf32> -> vector<64x256xf32>
    %19 = arith.addf %15, %18 : vector<64x256xf32>
    %c160 = arith.constant 160 : index
    %c0_11 = arith.constant 0 : index
    %20 = vector.load %arg1[%c160, %c0_11] : memref<816x256xbf16, #tpu.memory_space<vmem>>, vector<1x256xbf16>
    %21 = arith.extf %20 : vector<1x256xbf16> to vector<1x256xf32>
    %22 = vector.broadcast %21 : vector<1x256xf32> to vector<64x256xf32>
    %23 = arith.addf %19, %22 : vector<64x256xf32>
    %cst_12 = arith.constant 0.000000e+00 : f32
    %24 = vector.broadcast %cst_12 : f32 to vector<64x256xf32>
    %25 = arith.maximumf %23, %24 : vector<64x256xf32>
    %26 = vector.extract_strided_slice %25 {offsets = [0, 0], sizes = [64, 128], strides = [1, 1]} : vector<64x256xf32> to vector<64x128xf32>
    %27 = vector.extract_strided_slice %25 {offsets = [0, 128], sizes = [64, 128], strides = [1, 1]} : vector<64x256xf32> to vector<64x128xf32>
    %28 = arith.maximumf %26, %27 : vector<64x128xf32>
    %29 = vector.shape_cast %28 : vector<64x128xf32> to vector<32x2x128xf32>
    %cst_13 = arith.constant dense<0xFF800000> : vector<32x128xf32>
    %30 = vector.multi_reduction <maximumf>, %29, %cst_13 [1] : vector<32x2x128xf32> to vector<32x128xf32>
    %cst_14 = arith.constant 0.000000e+00 : f32
    %31 = vector.broadcast %cst_14 : f32 to vector<8x128xf32>
    %32 = tpu.concatenate %30, %31 in 0 : vector<32x128xf32>, vector<8x128xf32> -> vector<40x128xf32>
    %33 = arith.truncf %32 : vector<40x128xf32> to vector<40x128xbf16>
    %34 = vector.extract_strided_slice %33 {offsets = [0, 0], sizes = [32, 128], strides = [1, 1]} : vector<40x128xbf16> to vector<32x128xbf16>
    %c168 = arith.constant 168 : index
    %c0_15 = arith.constant 0 : index
    %35 = vector.load %arg1[%c168, %c0_15] : memref<816x256xbf16, #tpu.memory_space<vmem>>, vector<128x256xbf16>
    %cst_16 = arith.constant dense<0.000000e+00> : vector<32x256xf32>
    %36 = tpu.matmul %34, %35, %cst_16 {dimension_numbers = #tpu.dot_dimension_numbers<[1], [0], [0], [1], [0, 0, 1, 1], [], []>} : vector<32x128xbf16>, vector<128x256xbf16>, vector<32x256xf32> -> vector<32x256xf32>
    %37 = vector.extract_strided_slice %33 {offsets = [1, 0], sizes = [32, 128], strides = [1, 1]} : vector<40x128xbf16> to vector<32x128xbf16>
    %c296 = arith.constant 296 : index
    %c0_17 = arith.constant 0 : index
    %38 = vector.load %arg1[%c296, %c0_17] : memref<816x256xbf16, #tpu.memory_space<vmem>>, vector<128x256xbf16>
    %cst_18 = arith.constant dense<0.000000e+00> : vector<32x256xf32>
    %39 = tpu.matmul %37, %38, %cst_18 {dimension_numbers = #tpu.dot_dimension_numbers<[1], [0], [0], [1], [0, 0, 1, 1], [], []>} : vector<32x128xbf16>, vector<128x256xbf16>, vector<32x256xf32> -> vector<32x256xf32>
    %40 = arith.addf %36, %39 : vector<32x256xf32>
    %41 = vector.extract_strided_slice %33 {offsets = [2, 0], sizes = [32, 128], strides = [1, 1]} : vector<40x128xbf16> to vector<32x128xbf16>
    %c424 = arith.constant 424 : index
    %c0_19 = arith.constant 0 : index
    %42 = vector.load %arg1[%c424, %c0_19] : memref<816x256xbf16, #tpu.memory_space<vmem>>, vector<128x256xbf16>
    %cst_20 = arith.constant dense<0.000000e+00> : vector<32x256xf32>
    %43 = tpu.matmul %41, %42, %cst_20 {dimension_numbers = #tpu.dot_dimension_numbers<[1], [0], [0], [1], [0, 0, 1, 1], [], []>} : vector<32x128xbf16>, vector<128x256xbf16>, vector<32x256xf32> -> vector<32x256xf32>
    %44 = arith.addf %40, %43 : vector<32x256xf32>
    %45 = vector.extract_strided_slice %33 {offsets = [3, 0], sizes = [32, 128], strides = [1, 1]} : vector<40x128xbf16> to vector<32x128xbf16>
    %c552 = arith.constant 552 : index
    %c0_21 = arith.constant 0 : index
    %46 = vector.load %arg1[%c552, %c0_21] : memref<816x256xbf16, #tpu.memory_space<vmem>>, vector<128x256xbf16>
    %cst_22 = arith.constant dense<0.000000e+00> : vector<32x256xf32>
    %47 = tpu.matmul %45, %46, %cst_22 {dimension_numbers = #tpu.dot_dimension_numbers<[1], [0], [0], [1], [0, 0, 1, 1], [], []>} : vector<32x128xbf16>, vector<128x256xbf16>, vector<32x256xf32> -> vector<32x256xf32>
    %48 = arith.addf %44, %47 : vector<32x256xf32>
    %49 = vector.extract_strided_slice %33 {offsets = [4, 0], sizes = [32, 128], strides = [1, 1]} : vector<40x128xbf16> to vector<32x128xbf16>
    %c680 = arith.constant 680 : index
    %c0_23 = arith.constant 0 : index
    %50 = vector.load %arg1[%c680, %c0_23] : memref<816x256xbf16, #tpu.memory_space<vmem>>, vector<128x256xbf16>
    %cst_24 = arith.constant dense<0.000000e+00> : vector<32x256xf32>
    %51 = tpu.matmul %49, %50, %cst_24 {dimension_numbers = #tpu.dot_dimension_numbers<[1], [0], [0], [1], [0, 0, 1, 1], [], []>} : vector<32x128xbf16>, vector<128x256xbf16>, vector<32x256xf32> -> vector<32x256xf32>
    %52 = arith.addf %48, %51 : vector<32x256xf32>
    %c808 = arith.constant 808 : index
    %c0_25 = arith.constant 0 : index
    %53 = vector.load %arg1[%c808, %c0_25] : memref<816x256xbf16, #tpu.memory_space<vmem>>, vector<1x256xbf16>
    %54 = arith.extf %53 : vector<1x256xbf16> to vector<1x256xf32>
    %55 = vector.broadcast %54 : vector<1x256xf32> to vector<32x256xf32>
    %56 = arith.addf %52, %55 : vector<32x256xf32>
    %cst_26 = arith.constant 0.000000e+00 : f32
    %57 = vector.broadcast %cst_26 : f32 to vector<32x256xf32>
    %58 = arith.maximumf %56, %57 : vector<32x256xf32>
    %59 = vector.extract_strided_slice %58 {offsets = [0, 0], sizes = [32, 128], strides = [1, 1]} : vector<32x256xf32> to vector<32x128xf32>
    %60 = vector.extract_strided_slice %58 {offsets = [0, 128], sizes = [32, 128], strides = [1, 1]} : vector<32x256xf32> to vector<32x128xf32>
    %61 = arith.maximumf %59, %60 : vector<32x128xf32>
    %62 = vector.shape_cast %61 : vector<32x128xf32> to vector<16x2x128xf32>
    %cst_27 = arith.constant dense<0xFF800000> : vector<16x128xf32>
    %63 = vector.multi_reduction <maximumf>, %62, %cst_27 [1] : vector<16x2x128xf32> to vector<16x128xf32>
    %cst_28 = arith.constant 0.000000e+00 : f32
    %64 = vector.broadcast %cst_28 : f32 to vector<8x128xf32>
    %65 = tpu.concatenate %63, %64 in 0 : vector<16x128xf32>, vector<8x128xf32> -> vector<24x128xf32>
    %66 = arith.truncf %65 : vector<24x128xf32> to vector<24x128xbf16>
    %c768 = arith.constant 768 : index
    %c0_29 = arith.constant 0 : index
    %67 = vector.load %arg2[%c768, %c0_29] : memref<776x128xbf16, #tpu.memory_space<vmem>>, vector<3x128xbf16>
    %68 = arith.extf %67 : vector<3x128xbf16> to vector<3x128xf32>
    %69 = vector.extract_strided_slice %66 {offsets = [0, 0], sizes = [16, 128], strides = [1, 1]} : vector<24x128xbf16> to vector<16x128xbf16>
    %c0_30 = arith.constant 0 : index
    %c0_31 = arith.constant 0 : index
    %70 = vector.load %arg2[%c0_30, %c0_31] : memref<776x128xbf16, #tpu.memory_space<vmem>>, vector<128x128xbf16>
    %cst_32 = arith.constant dense<0.000000e+00> : vector<16x128xf32>
    %71 = tpu.matmul %69, %70, %cst_32 {dimension_numbers = #tpu.dot_dimension_numbers<[1], [0], [0], [1], [0, 0, 1, 1], [], []>} : vector<16x128xbf16>, vector<128x128xbf16>, vector<16x128xf32> -> vector<16x128xf32>
    %72 = vector.extract_strided_slice %66 {offsets = [1, 0], sizes = [16, 128], strides = [1, 1]} : vector<24x128xbf16> to vector<16x128xbf16>
    %c128_33 = arith.constant 128 : index
    %c0_34 = arith.constant 0 : index
    %73 = vector.load %arg2[%c128_33, %c0_34] : memref<776x128xbf16, #tpu.memory_space<vmem>>, vector<128x128xbf16>
    %cst_35 = arith.constant dense<0.000000e+00> : vector<16x128xf32>
    %74 = tpu.matmul %72, %73, %cst_35 {dimension_numbers = #tpu.dot_dimension_numbers<[1], [0], [0], [1], [0, 0, 1, 1], [], []>} : vector<16x128xbf16>, vector<128x128xbf16>, vector<16x128xf32> -> vector<16x128xf32>
    %75 = arith.addf %71, %74 : vector<16x128xf32>
    %76 = vector.extract_strided_slice %66 {offsets = [2, 0], sizes = [16, 128], strides = [1, 1]} : vector<24x128xbf16> to vector<16x128xbf16>
    %c256 = arith.constant 256 : index
    %c0_36 = arith.constant 0 : index
    %77 = vector.load %arg2[%c256, %c0_36] : memref<776x128xbf16, #tpu.memory_space<vmem>>, vector<128x128xbf16>
    %cst_37 = arith.constant dense<0.000000e+00> : vector<16x128xf32>
    %78 = tpu.matmul %76, %77, %cst_37 {dimension_numbers = #tpu.dot_dimension_numbers<[1], [0], [0], [1], [0, 0, 1, 1], [], []>} : vector<16x128xbf16>, vector<128x128xbf16>, vector<16x128xf32> -> vector<16x128xf32>
    %79 = arith.addf %75, %78 : vector<16x128xf32>
    %80 = vector.extract_strided_slice %66 {offsets = [3, 0], sizes = [16, 128], strides = [1, 1]} : vector<24x128xbf16> to vector<16x128xbf16>
    %c384 = arith.constant 384 : index
    %c0_38 = arith.constant 0 : index
    %81 = vector.load %arg2[%c384, %c0_38] : memref<776x128xbf16, #tpu.memory_space<vmem>>, vector<128x128xbf16>
    %cst_39 = arith.constant dense<0.000000e+00> : vector<16x128xf32>
    %82 = tpu.matmul %80, %81, %cst_39 {dimension_numbers = #tpu.dot_dimension_numbers<[1], [0], [0], [1], [0, 0, 1, 1], [], []>} : vector<16x128xbf16>, vector<128x128xbf16>, vector<16x128xf32> -> vector<16x128xf32>
    %83 = arith.addf %79, %82 : vector<16x128xf32>
    %84 = vector.extract_strided_slice %68 {offsets = [0, 0], sizes = [1, 128], strides = [1, 1]} : vector<3x128xf32> to vector<1x128xf32>
    %85 = vector.broadcast %84 : vector<1x128xf32> to vector<16x128xf32>
    %86 = arith.addf %83, %85 : vector<16x128xf32>
    %cst_40 = arith.constant 0.000000e+00 : f32
    %87 = vector.broadcast %cst_40 : f32 to vector<16x128xf32>
    %88 = arith.maximumf %86, %87 : vector<16x128xf32>
    %89 = arith.truncf %88 : vector<16x128xf32> to vector<16x128xbf16>
    %c512 = arith.constant 512 : index
    %c0_41 = arith.constant 0 : index
    %90 = vector.load %arg2[%c512, %c0_41] : memref<776x128xbf16, #tpu.memory_space<vmem>>, vector<128x128xbf16>
    %cst_42 = arith.constant dense<0.000000e+00> : vector<16x128xf32>
    %91 = tpu.matmul %89, %90, %cst_42 {dimension_numbers = #tpu.dot_dimension_numbers<[1], [0], [0], [1], [0, 0, 1, 1], [], []>} : vector<16x128xbf16>, vector<128x128xbf16>, vector<16x128xf32> -> vector<16x128xf32>
    %92 = vector.extract_strided_slice %68 {offsets = [1, 0], sizes = [1, 128], strides = [1, 1]} : vector<3x128xf32> to vector<1x128xf32>
    %93 = vector.broadcast %92 : vector<1x128xf32> to vector<16x128xf32>
    %94 = arith.addf %91, %93 : vector<16x128xf32>
    %cst_43 = arith.constant 0.000000e+00 : f32
    %95 = vector.broadcast %cst_43 : f32 to vector<16x128xf32>
    %96 = arith.maximumf %94, %95 : vector<16x128xf32>
    %97 = arith.truncf %96 : vector<16x128xf32> to vector<16x128xbf16>
    %c640 = arith.constant 640 : index
    %c0_44 = arith.constant 0 : index
    %98 = vector.load %arg2[%c640, %c0_44] : memref<776x128xbf16, #tpu.memory_space<vmem>>, vector<128x128xbf16>
    %cst_45 = arith.constant dense<0.000000e+00> : vector<16x128xf32>
    %99 = tpu.matmul %97, %98, %cst_45 {dimension_numbers = #tpu.dot_dimension_numbers<[1], [0], [0], [1], [0, 0, 1, 1], [], []>} : vector<16x128xbf16>, vector<128x128xbf16>, vector<16x128xf32> -> vector<16x128xf32>
    %100 = vector.extract_strided_slice %68 {offsets = [2, 0], sizes = [1, 128], strides = [1, 1]} : vector<3x128xf32> to vector<1x128xf32>
    %101 = vector.broadcast %100 : vector<1x128xf32> to vector<16x128xf32>
    %102 = arith.addf %99, %101 : vector<16x128xf32>
    %c0_46 = arith.constant 0 : index
    %c0_47 = arith.constant 0 : index
    %103 = vector.load %arg3[%c0_46, %c0_47] : memref<16x128xf32, #tpu.memory_space<vmem>>, vector<16x128xf32>
    tpu.vector_store %arg3[%c0_46, %c0_47], %102 {strides = array<i32>} : memref<16x128xf32, #tpu.memory_space<vmem>>, vector<16x128xf32>,
    return
  }
}

</mosaic_0001>

<llo_original>
// kernel: convnet_forward.1
$region0: #{convnet_forward.1}
  #allocation0 [shape = 'u32[]', space=smem, size = 0x4, offset = 0x4, fixed_abs, tag = 'smem constant byte address 0x4 - core index']
  #allocation1 [shape = 'u32[144,128]{1,0:T(1,128)}', space=vmem, size = 0x12000, scoped, tag = 'internal scratch']
  %s0 = inlined_call_operand.vmem [shape: bf16[72,28], index: 0, kind: input, shape index: {}]
  %s1 = inlined_call_operand.hbm [shape: bf16[816,256], index: 1, kind: input, shape index: {}]
  %s2 = inlined_call_operand.vmem [shape: bf16[776,128], index: 2, kind: input, shape index: {}]
  %s3 = inlined_call_operand.vmem [shape: f32[16,128], index: 3, kind: output, shape index: {}]
  %s4 = sld [smem:[#allocation0]]
  $region26: #{convnet_forward.1} parent=0
    _
  %s6 = ssub.s32 1, %s4
  %s7 = scalar_select 0, %s6, %s4
  $region1: #{convnet_forward.1} parent=0
    #allocation2 [shape = 'u8[417792]{0}', space=vmem, size = 0x66000, scoped, tag = 'input window, operand 1, single buffered']
    #allocation3 [shape = 's32[1]{0}', space=sflag, size = 0x4, scoped, tag = 'scoped memory for convnet_forward.1']
    %8 = vsyncpa [#allocation3], 0
    // Predicated region
    $region2: #{convnet_forward.1} parent=1 // pred_check
      _
    $region3: #{convnet_forward.1} parent=1 // pred_check_branch
      %10 = sbr.rel (0) target = $region5
    $region4: #{convnet_forward.1} parent=1 // pred_region
      _
    $region5: #{convnet_forward.1} parent=1 // pred_fallthru
      _
    // Predicated region
    $region6: #{convnet_forward.1} parent=1 // pred_check
      _
    $region7: #{convnet_forward.1} parent=1 // pred_check_branch
      %12 = sbr.rel (0) target = $region9
    $region8: #{convnet_forward.1} parent=1 // pred_region
      %s14 = ssub.s32 13056, 13056
      %15 = vsyncadd [#allocation3], %s14
      %s16 = sshll.u32 [#allocation2], 4
      %s17 = int_to_ptr.vmem [resolvable:$true] %s16
      %22 = dma.hbm_to_vmem [thread:$0]  %s1, 13056, %s17, [#allocation3], 128, 128, 8
    $region9: #{convnet_forward.1} parent=1 // pred_fallthru
      _
    // Predicated region
    $region10: #{convnet_forward.1} parent=1 // pred_check
      _
    $region11: #{convnet_forward.1} parent=1 // pred_check_branch
      %24 = sbr.rel (0) target = $region13
    $region12: #{convnet_forward.1} parent=1 // pred_region
      _
    $region13: #{convnet_forward.1} parent=1 // pred_fallthru
      _
    // Predicated region
    $region14: #{convnet_forward.1} parent=1 // pred_check
      _
    $region15: #{convnet_forward.1} parent=1 // pred_check_branch
      %26 = sbr.rel (0) target = $region17
    $region16: #{convnet_forward.1} parent=1 // pred_region
      %27 = dma.done [#allocation3], 13056
    $region17: #{convnet_forward.1} parent=1 // pred_fallthru
      _
    %v29 = vld [vmem:[%s0] sm:$0xf]
    %v30 = vld [vmem:[%s0 + $0x4] sm:$0xf]
    %v31 = vld [vmem:[%s0 + $0x8] sm:$0xf]
    %v32 = vld [vmem:[%s0 + $0xc] sm:$0xf]
    %v33 = vld [vmem:[%s0 + $0x10] sm:$0xf]
    %v34 = vld [vmem:[%s0 + $0x14] sm:$0xf]
    %v35 = vld [vmem:[%s0 + $0x18] sm:$0xf]
    %v36 = vld [vmem:[%s0 + $0x1c] sm:$0xf]
    %v37 = vld [vmem:[%s0 + $0x20] sm:$0xf]
    %v38 = vld [vmem:[#allocation2] sm:$0xff]
    %v39 = vld [vmem:[#allocation2 + $0x8] sm:$0xff]
    %v40 = vld [vmem:[#allocation2 + $0x10] sm:$0xff]
    %v41 = vld [vmem:[#allocation2 + $0x18] sm:$0x33]
    %v42 = vld [vmem:[#allocation2 + $0x20] sm:$0xff]
    %v43 = vld [vmem:[#allocation2 + $0x28] sm:$0xff]
    %v44 = vld [vmem:[#allocation2 + $0x30] sm:$0xff]
    %v45 = vld [vmem:[#allocation2 + $0x38] sm:$0x33]
    %v55 = vunpack.c.l.b16 %v29
    %v56 = vunpack.c.l.b16 %v30
    %v57 = vunpack.c.l.b16 %v31
    %v58 = vunpack.c.l.b16 %v32
    %v59 = vunpack.c.l.b16 %v33
    %v60 = vunpack.c.l.b16 %v34
    %v61 = vunpack.c.l.b16 %v35
    %v62 = vunpack.c.l.b16 %v36
    %v63 = vunpack.c.l.b16 %v37
    %v64 = vpack.c.b16 %v56, %v55
    %v65 = vpack.c.b16 %v58, %v57
    %v66 = vpack.c.b16 %v60, %v59
    %v67 = vpack.c.b16 %v62, %v61
    %v68 = vpack.c.b16 %v63, %v63
    %vm69 = vsmask.f32 7424
    %v71 = vshrl.u32 %v64, 16
    %v73 = vshll.u32 %v64, 16
    %v75 = vrot.slane %v73, 1
    %v76 = vor.u32 %v71, %v75
    %v78 = vshll.u32 %v65, 16
    %v80 = vrot.slane %v78, 1
    %v81 = vsel %vm69, %v76, %v80
    %v82 = vshrl.u32 %v65, 16
    %v84 = vor.u32 %v82, %v80
    %v86 = vshll.u32 %v66, 16
    %v88 = vrot.slane %v86, 1
    %v89 = vsel %vm69, %v84, %v88
    %v90 = vshrl.u32 %v66, 16
    %v92 = vor.u32 %v90, %v88
    %v94 = vshll.u32 %v67, 16
    %v96 = vrot.slane %v94, 1
    %v97 = vsel %vm69, %v92, %v96
    %v98 = vshrl.u32 %v67, 16
    %v100 = vor.u32 %v98, %v96
    %v102 = vshll.u32 %v68, 16
    %v104 = vrot.slane %v102, 1
    %v105 = vsel %vm69, %v100, %v104
    %v110 = vunpack.c.l.b16 %v42
    %v111 = vunpack.c.h.b16 %v42
    %v112 = vunpack.c.l.b16 %v43
    %v113 = vunpack.c.h.b16 %v43
    %v114 = vunpack.c.l.b16 %v44
    %v115 = vunpack.c.h.b16 %v44
    %v116 = vunpack.c.l.b16 %v45
    %v117 = vunpack.c.h.b16 %v45
    %v118 = vpack.c.b16 %v112, %v110
    %v119 = vpack.c.b16 %v113, %v111
    %v120 = vpack.c.b16 %v116, %v114
    %v121 = vpack.c.b16 %v117, %v115
    %vm124 = vcmask 228352
    %v126 = vsel %vm124, %v81, 0
    %v129 = vsel %vm124, %v89, 0
    %v132 = vsel %vm124, %v97, 0
    %v135 = vsel %vm124, %v105, 0
    %vm137 = vcmask 1045504
    %v139 = vsel %vm137, %v120, 0
    %v142 = vsel %vm137, %v121, 0
    %144 = vmatprep.subr.bf16.mxu0 0
    %145 = vmatpush1.bf16.msra.mxu0 0
    %146 = vmatprep.subr.bf16.mxu0 0
    %147 = vmatpush1.bf16.msra.mxu0 0
    %148 = vmatprep.subr.bf16.mxu0 0
    %149 = vmatpush1.bf16.msra.mxu0 0
    %150 = vmatprep.subr.bf16.mxu0 0
    %151 = vmatpush1.bf16.msra.mxu0 0
    %152 = vmatprep.subr.bf16.mxu0 0
    %153 = vmatpush1.bf16.msra.mxu0 0
    %154 = vmatprep.subr.bf16.mxu0 0
    %155 = vmatpush1.bf16.msra.mxu0 0
    %156 = vmatprep.subr.bf16.mxu0 %v142
    %157 = vmatpush1.bf16.msra.mxu0 %v139
    %158 = vmatprep.subr.bf16.mxu0 %v119
    %159 = vmatpush1.bf16.msra.mxu0 %v118
    %160 = vmatprep.subr.bf16.mxu0 0
    %161 = vmatpush2.bf16.msra.mxu0 0
    %162 = vmatprep.subr.bf16.mxu0 0
    %163 = vmatpush2.bf16.msra.mxu0 0
    %164 = vmatprep.subr.bf16.mxu0 0
    %165 = vmatpush2.bf16.msra.mxu0 0
    %166 = vmatprep.subr.bf16.mxu0 0
    %167 = vmatpush2.bf16.msra.mxu0 0
    %168 = vmatprep.subr.bf16.mxu0 0
    %169 = vmatpush2.bf16.msra.mxu0 0
    %170 = vmatprep.subr.bf16.mxu0 0
    %171 = vmatpush2.bf16.msra.mxu0 0
    %172 = vmatprep.subr.bf16.mxu0 0
    %173 = vmatpush2.bf16.msra.mxu0 0
    %174 = vmatprep.subr.bf16.mxu0 0
    %175 = vmatpush2.bf16.msra.mxu0 0
    %176 = vmatprep.mubr.bf16.mxu0 0
    %177 = vmatmul.mubr.bf16.gmra.mxu0 %v126
    %v178 = vpop.f32.mrf.mxu0
    %v179 = vadd.f32 0.0, %v178
    %v180 = vpop.f32.mrf.mxu0
    %v181 = vadd.f32 0.0, %v180
    %v182 = vpop.f32.mrf.mxu0
    %v183 = vadd.f32 0.0, %v182
    %v184 = vpop.f32.mrf.mxu0
    %v185 = vadd.f32 0.0, %v184
    %186 = vmatprep.mubr.bf16.mxu0 0
    %187 = vmatmul.mubr.bf16.gmra.mxu0 %v129
    %v188 = vpop.f32.mrf.mxu0
    %v189 = vadd.f32 0.0, %v188
    %v190 = vpop.f32.mrf.mxu0
    %v191 = vadd.f32 0.0, %v190
    %v192 = vpop.f32.mrf.mxu0
    %v193 = vadd.f32 0.0, %v192
    %v194 = vpop.f32.mrf.mxu0
    %v195 = vadd.f32 0.0, %v194
    %196 = vmatprep.mubr.bf16.mxu0 0
    %197 = vmatmul.mubr.bf16.gmra.mxu0 %v132
    %v198 = vpop.f32.mrf.mxu0
    %v199 = vadd.f32 0.0, %v198
    %v200 = vpop.f32.mrf.mxu0
    %v201 = vadd.f32 0.0, %v200
    %v202 = vpop.f32.mrf.mxu0
    %v203 = vadd.f32 0.0, %v202
    %v204 = vpop.f32.mrf.mxu0
    %v205 = vadd.f32 0.0, %v204
    %206 = vmatprep.mubr.bf16.mxu0 0
    %207 = vmatmul.mubr.bf16.gmra.mxu0 %v135
    %v208 = vpop.f32.mrf.mxu0
    %v209 = vadd.f32 0.0, %v208
    %v210 = vpop.f32.mrf.mxu0
    %v211 = vadd.f32 0.0, %v210
    %v212 = vpop.f32.mrf.mxu0
    %v213 = vadd.f32 0.0, %v212
    %v214 = vpop.f32.mrf.mxu0
    %v215 = vadd.f32 0.0, %v214
    %216 = vdwg.mxu0
    %v221 = vunpack.c.l.b16 %v38
    %v222 = vunpack.c.h.b16 %v38
    %v223 = vunpack.c.l.b16 %v39
    %v224 = vunpack.c.h.b16 %v39
    %v225 = vunpack.c.l.b16 %v40
    %v226 = vunpack.c.h.b16 %v40
    %v227 = vunpack.c.l.b16 %v41
    %v228 = vunpack.c.h.b16 %v41
    %v229 = vpack.c.b16 %v223, %v221
    %v230 = vpack.c.b16 %v224, %v222
    %v231 = vpack.c.b16 %v227, %v225
    %v232 = vpack.c.b16 %v228, %v226
    %v235 = vsel %vm124, %v64, 0
    %v237 = vsel %vm124, %v65, 0
    %v239 = vsel %vm124, %v66, 0
    %v241 = vsel %vm124, %v67, 0
    %v244 = vsel %vm137, %v231, 0
    %v247 = vsel %vm137, %v232, 0
    %249 = vmatprep.subr.bf16.mxu0 0
    %250 = vmatpush1.bf16.msra.mxu0 0
    %251 = vmatprep.subr.bf16.mxu0 0
    %252 = vmatpush1.bf16.msra.mxu0 0
    %253 = vmatprep.subr.bf16.mxu0 0
    %254 = vmatpush1.bf16.msra.mxu0 0
    %255 = vmatprep.subr.bf16.mxu0 0
    %256 = vmatpush1.bf16.msra.mxu0 0
    %257 = vmatprep.subr.bf16.mxu0 0
    %258 = vmatpush1.bf16.msra.mxu0 0
    %259 = vmatprep.subr.bf16.mxu0 0
    %260 = vmatpush1.bf16.msra.mxu0 0
    %261 = vmatprep.subr.bf16.mxu0 %v247
    %262 = vmatpush1.bf16.msra.mxu0 %v244
    %263 = vmatprep.subr.bf16.mxu0 %v230
    %264 = vmatpush1.bf16.msra.mxu0 %v229
    %265 = vmatprep.subr.bf16.mxu0 0
    %266 = vmatpush2.bf16.msra.mxu0 0
    %267 = vmatprep.subr.bf16.mxu0 0
    %268 = vmatpush2.bf16.msra.mxu0 0
    %269 = vmatprep.subr.bf16.mxu0 0
    %270 = vmatpush2.bf16.msra.mxu0 0
    %271 = vmatprep.subr.bf16.mxu0 0
    %272 = vmatpush2.bf16.msra.mxu0 0
    %273 = vmatprep.subr.bf16.mxu0 0
    %274 = vmatpush2.bf16.msra.mxu0 0
    %275 = vmatprep.subr.bf16.mxu0 0
    %276 = vmatpush2.bf16.msra.mxu0 0
    %277 = vmatprep.subr.bf16.mxu0 0
    %278 = vmatpush2.bf16.msra.mxu0 0
    %279 = vmatprep.subr.bf16.mxu0 0
    %280 = vmatpush2.bf16.msra.mxu0 0
    %281 = vmatprep.mubr.bf16.mxu0 0
    %282 = vmatmul.mubr.bf16.gmra.mxu0 %v235
    %v283 = vpop.f32.mrf.mxu0
    %v284 = vadd.f32 %v179, %v283
    %v285 = vpop.f32.mrf.mxu0
    %v286 = vadd.f32 %v181, %v285
    %v287 = vpop.f32.mrf.mxu0
    %v288 = vadd.f32 %v183, %v287
    %v289 = vpop.f32.mrf.mxu0
    %v290 = vadd.f32 %v185, %v289
    %291 = vmatprep.mubr.bf16.mxu0 0
    %292 = vmatmul.mubr.bf16.gmra.mxu0 %v237
    %v293 = vpop.f32.mrf.mxu0
    %v294 = vadd.f32 %v189, %v293
    %v295 = vpop.f32.mrf.mxu0
    %v296 = vadd.f32 %v191, %v295
    %v297 = vpop.f32.mrf.mxu0
    %v298 = vadd.f32 %v193, %v297
    %v299 = vpop.f32.mrf.mxu0
    %v300 = vadd.f32 %v195, %v299
    %301 = vmatprep.mubr.bf16.mxu0 0
    %302 = vmatmul.mubr.bf16.gmra.mxu0 %v239
    %v303 = vpop.f32.mrf.mxu0
    %v304 = vadd.f32 %v199, %v303
    %v305 = vpop.f32.mrf.mxu0
    %v306 = vadd.f32 %v201, %v305
    %v307 = vpop.f32.mrf.mxu0
    %v308 = vadd.f32 %v203, %v307
    %v309 = vpop.f32.mrf.mxu0
    %v310 = vadd.f32 %v205, %v309
    %311 = vmatprep.mubr.bf16.mxu0 0
    %312 = vmatmul.mubr.bf16.gmra.mxu0 %v241
    %v313 = vpop.f32.mrf.mxu0
    %v314 = vadd.f32 %v209, %v313
    %v315 = vpop.f32.mrf.mxu0
    %v316 = vadd.f32 %v211, %v315
    %v317 = vpop.f32.mrf.mxu0
    %v318 = vadd.f32 %v213, %v317
    %v319 = vpop.f32.mrf.mxu0
    %v320 = vadd.f32 %v215, %v319
    %321 = vdwg.mxu0
    %v322 = vld [vmem:[#allocation2 + $0x40] sm:$0xff]
    %v323 = vld [vmem:[#allocation2 + $0x48] sm:$0xff]
    %v324 = vld [vmem:[#allocation2 + $0x50] sm:$0xff]
    %v325 = vld [vmem:[#allocation2 + $0x58] sm:$0x33]
    %vm326 = vcmask 1046528
    %v327 = vrot.slane %v64, 1
    %v328 = vrot.slane %v65, 1
    %v329 = vsel %vm326, %v327, %v328
    %v330 = vrot.slane %v66, 1
    %v331 = vsel %vm326, %v328, %v330
    %v332 = vrot.slane %v67, 1
    %v333 = vsel %vm326, %v330, %v332
    %v334 = vrot.slane %v68, 1
    %v335 = vsel %vm326, %v332, %v334
    %v340 = vunpack.c.l.b16 %v322
    %v341 = vunpack.c.h.b16 %v322
    %v342 = vunpack.c.l.b16 %v323
    %v343 = vunpack.c.h.b16 %v323
    %v344 = vunpack.c.l.b16 %v324
    %v345 = vunpack.c.h.b16 %v324
    %v346 = vunpack.c.l.b16 %v325
    %v347 = vunpack.c.h.b16 %v325
    %v348 = vpack.c.b16 %v342, %v340
    %v349 = vpack.c.b16 %v343, %v341
    %v350 = vpack.c.b16 %v346, %v344
    %v351 = vpack.c.b16 %v347, %v345
    %v355 = vsel %vm124, %v329, 0
    %v358 = vsel %vm124, %v331, 0
    %v361 = vsel %vm124, %v333, 0
    %v364 = vsel %vm124, %v335, 0
    %v367 = vsel %vm137, %v350, 0
    %v370 = vsel %vm137, %v351, 0
    %372 = vmatprep.subr.bf16.mxu0 0
    %373 = vmatpush1.bf16.msra.mxu0 0
    %374 = vmatprep.subr.bf16.mxu0 0
    %375 = vmatpush1.bf16.msra.mxu0 0
    %376 = vmatprep.subr.bf16.mxu0 0
    %377 = vmatpush1.bf16.msra.mxu0 0
    %378 = vmatprep.subr.bf16.mxu0 0
    %379 = vmatpush1.bf16.msra.mxu0 0
    %380 = vmatprep.subr.bf16.mxu0 0
    %381 = vmatpush1.bf16.msra.mxu0 0
    %382 = vmatprep.subr.bf16.mxu0 0
    %383 = vmatpush1.bf16.msra.mxu0 0
    %384 = vmatprep.subr.bf16.mxu0 %v370
    %385 = vmatpush1.bf16.msra.mxu0 %v367
    %386 = vmatprep.subr.bf16.mxu0 %v349
    %387 = vmatpush1.bf16.msra.mxu0 %v348
    %388 = vmatprep.subr.bf16.mxu0 0
    %389 = vmatpush2.bf16.msra.mxu0 0
    %390 = vmatprep.subr.bf16.mxu0 0
    %391 = vmatpush2.bf16.msra.mxu0 0
    %392 = vmatprep.subr.bf16.mxu0 0
    %393 = vmatpush2.bf16.msra.mxu0 0
    %394 = vmatprep.subr.bf16.mxu0 0
    %395 = vmatpush2.bf16.msra.mxu0 0
    %396 = vmatprep.subr.bf16.mxu0 0
    %397 = vmatpush2.bf16.msra.mxu0 0
    %398 = vmatprep.subr.bf16.mxu0 0
    %399 = vmatpush2.bf16.msra.mxu0 0
    %400 = vmatprep.subr.bf16.mxu0 0
    %401 = vmatpush2.bf16.msra.mxu0 0
    %402 = vmatprep.subr.bf16.mxu0 0
    %403 = vmatpush2.bf16.msra.mxu0 0
    %404 = vmatprep.mubr.bf16.mxu0 0
    %405 = vmatmul.mubr.bf16.gmra.mxu0 %v355
    %v406 = vpop.f32.mrf.mxu0
    %v407 = vadd.f32 0.0, %v406
    %v408 = vpop.f32.mrf.mxu0
    %v409 = vadd.f32 0.0, %v408
    %v410 = vpop.f32.mrf.mxu0
    %v411 = vadd.f32 0.0, %v410
    %v412 = vpop.f32.mrf.mxu0
    %v413 = vadd.f32 0.0, %v412
    %414 = vmatprep.mubr.bf16.mxu0 0
    %415 = vmatmul.mubr.bf16.gmra.mxu0 %v358
    %v416 = vpop.f32.mrf.mxu0
    %v417 = vadd.f32 0.0, %v416
    %v418 = vpop.f32.mrf.mxu0
    %v419 = vadd.f32 0.0, %v418
    %v420 = vpop.f32.mrf.mxu0
    %v421 = vadd.f32 0.0, %v420
    %v422 = vpop.f32.mrf.mxu0
    %v423 = vadd.f32 0.0, %v422
    %424 = vmatprep.mubr.bf16.mxu0 0
    %425 = vmatmul.mubr.bf16.gmra.mxu0 %v361
    %v426 = vpop.f32.mrf.mxu0
    %v427 = vadd.f32 0.0, %v426
    %v428 = vpop.f32.mrf.mxu0
    %v429 = vadd.f32 0.0, %v428
    %v430 = vpop.f32.mrf.mxu0
    %v431 = vadd.f32 0.0, %v430
    %v432 = vpop.f32.mrf.mxu0
    %v433 = vadd.f32 0.0, %v432
    %434 = vmatprep.mubr.bf16.mxu0 0
    %435 = vmatmul.mubr.bf16.gmra.mxu0 %v364
    %v436 = vpop.f32.mrf.mxu0
    %v437 = vadd.f32 0.0, %v436
    %v438 = vpop.f32.mrf.mxu0
    %v439 = vadd.f32 0.0, %v438
    %v440 = vpop.f32.mrf.mxu0
    %v441 = vadd.f32 0.0, %v440
    %v442 = vpop.f32.mrf.mxu0
    %v443 = vadd.f32 0.0, %v442
    %444 = vdwg.mxu0
    %v445 = vadd.f32 %v284, %v407
    %v446 = vadd.f32 %v286, %v409
    %v447 = vadd.f32 %v288, %v411
    %v448 = vadd.f32 %v290, %v413
    %v449 = vadd.f32 %v294, %v417
    %v450 = vadd.f32 %v296, %v419
    %v451 = vadd.f32 %v298, %v421
    %v452 = vadd.f32 %v300, %v423
    %v453 = vadd.f32 %v304, %v427
    %v454 = vadd.f32 %v306, %v429
    %v455 = vadd.f32 %v308, %v431
    %v456 = vadd.f32 %v310, %v433
    %v457 = vadd.f32 %v314, %v437
    %v458 = vadd.f32 %v316, %v439
    %v459 = vadd.f32 %v318, %v441
    %v460 = vadd.f32 %v320, %v443
    %v461 = vld [vmem:[#allocation2 + $0x60] sm:$0xff]
    %v462 = vld [vmem:[#allocation2 + $0x68] sm:$0xff]
    %v463 = vld [vmem:[#allocation2 + $0x70] sm:$0xff]
    %v464 = vld [vmem:[#allocation2 + $0x78] sm:$0x33]
    %vm465 = vsmask.f32 6400
    %v466 = vrot.slane %v71, 1
    %v467 = vrot.slane %v73, 2
    %v468 = vor.u32 %v466, %v467
    %v469 = vrot.slane %v82, 1
    %v470 = vrot.slane %v78, 2
    %v471 = vor.u32 %v469, %v470
    %v472 = vsel %vm465, %v468, %v471
    %v473 = vrot.slane %v90, 1
    %v474 = vrot.slane %v86, 2
    %v475 = vor.u32 %v473, %v474
    %v476 = vsel %vm465, %v471, %v475
    %v477 = vrot.slane %v98, 1
    %v478 = vrot.slane %v94, 2
    %v479 = vor.u32 %v477, %v478
    %v480 = vsel %vm465, %v475, %v479
    %v481 = vshrl.u32 %v68, 16
    %v483 = vrot.slane %v481, 1
    %v484 = vrot.slane %v102, 2
    %v485 = vor.u32 %v483, %v484
    %v486 = vsel %vm465, %v479, %v485
    %v491 = vunpack.c.l.b16 %v461
    %v492 = vunpack.c.h.b16 %v461
    %v493 = vunpack.c.l.b16 %v462
    %v494 = vunpack.c.h.b16 %v462
    %v495 = vunpack.c.l.b16 %v463
    %v496 = vunpack.c.h.b16 %v463
    %v497 = vunpack.c.l.b16 %v464
    %v498 = vunpack.c.h.b16 %v464
    %v499 = vpack.c.b16 %v493, %v491
    %v500 = vpack.c.b16 %v494, %v492
    %v501 = vpack.c.b16 %v497, %v495
    %v502 = vpack.c.b16 %v498, %v496
    %v506 = vsel %vm124, %v472, 0
    %v509 = vsel %vm124, %v476, 0
    %v512 = vsel %vm124, %v480, 0
    %v515 = vsel %vm124, %v486, 0
    %v518 = vsel %vm137, %v501, 0
    %v521 = vsel %vm137, %v502, 0
    %523 = vmatprep.subr.bf16.mxu0 0
    %524 = vmatpush1.bf16.msra.mxu0 0
    %525 = vmatprep.subr.bf16.mxu0 0
    %526 = vmatpush1.bf16.msra.mxu0 0
    %527 = vmatprep.subr.bf16.mxu0 0
    %528 = vmatpush1.bf16.msra.mxu0 0
    %529 = vmatprep.subr.bf16.mxu0 0
    %530 = vmatpush1.bf16.msra.mxu0 0
    %531 = vmatprep.subr.bf16.mxu0 0
    %532 = vmatpush1.bf16.msra.mxu0 0
    %533 = vmatprep.subr.bf16.mxu0 0
    %534 = vmatpush1.bf16.msra.mxu0 0
    %535 = vmatprep.subr.bf16.mxu0 %v521
    %536 = vmatpush1.bf16.msra.mxu0 %v518
    %537 = vmatprep.subr.bf16.mxu0 %v500
    %538 = vmatpush1.bf16.msra.mxu0 %v499
    %539 = vmatprep.subr.bf16.mxu0 0
    %540 = vmatpush2.bf16.msra.mxu0 0
    %541 = vmatprep.subr.bf16.mxu0 0
    %542 = vmatpush2.bf16.msra.mxu0 0
    %543 = vmatprep.subr.bf16.mxu0 0
    %544 = vmatpush2.bf16.msra.mxu0 0
    %545 = vmatprep.subr.bf16.mxu0 0
    %546 = vmatpush2.bf16.msra.mxu0 0
    %547 = vmatprep.subr.bf16.mxu0 0
    %548 = vmatpush2.bf16.msra.mxu0 0
    %549 = vmatprep.subr.bf16.mxu0 0
    %550 = vmatpush2.bf16.msra.mxu0 0
    %551 = vmatprep.subr.bf16.mxu0 0
    %552 = vmatpush2.bf16.msra.mxu0 0
    %553 = vmatprep.subr.bf16.mxu0 0
    %554 = vmatpush2.bf16.msra.mxu0 0
    %555 = vmatprep.mubr.bf16.mxu0 0
    %556 = vmatmul.mubr.bf16.gmra.mxu0 %v506
    %v557 = vpop.f32.mrf.mxu0
    %v558 = vadd.f32 0.0, %v557
    %v559 = vpop.f32.mrf.mxu0
    %v560 = vadd.f32 0.0, %v559
    %v561 = vpop.f32.mrf.mxu0
    %v562 = vadd.f32 0.0, %v561
    %v563 = vpop.f32.mrf.mxu0
    %v564 = vadd.f32 0.0, %v563
    %565 = vmatprep.mubr.bf16.mxu0 0
    %566 = vmatmul.mubr.bf16.gmra.mxu0 %v509
    %v567 = vpop.f32.mrf.mxu0
    %v568 = vadd.f32 0.0, %v567
    %v569 = vpop.f32.mrf.mxu0
    %v570 = vadd.f32 0.0, %v569
    %v571 = vpop.f32.mrf.mxu0
    %v572 = vadd.f32 0.0, %v571
    %v573 = vpop.f32.mrf.mxu0
    %v574 = vadd.f32 0.0, %v573
    %575 = vmatprep.mubr.bf16.mxu0 0
    %576 = vmatmul.mubr.bf16.gmra.mxu0 %v512
    %v577 = vpop.f32.mrf.mxu0
    %v578 = vadd.f32 0.0, %v577
    %v579 = vpop.f32.mrf.mxu0
    %v580 = vadd.f32 0.0, %v579
    %v581 = vpop.f32.mrf.mxu0
    %v582 = vadd.f32 0.0, %v581
    %v583 = vpop.f32.mrf.mxu0
    %v584 = vadd.f32 0.0, %v583
    %585 = vmatprep.mubr.bf16.mxu0 0
    %586 = vmatmul.mubr.bf16.gmra.mxu0 %v515
    %v587 = vpop.f32.mrf.mxu0
    %v588 = vadd.f32 0.0, %v587
    %v589 = vpop.f32.mrf.mxu0
    %v590 = vadd.f32 0.0, %v589
    %v591 = vpop.f32.mrf.mxu0
    %v592 = vadd.f32 0.0, %v591
    %v593 = vpop.f32.mrf.mxu0
    %v594 = vadd.f32 0.0, %v593
    %595 = vdwg.mxu0
    %v596 = vadd.f32 %v445, %v558
    %v597 = vadd.f32 %v446, %v560
    %v598 = vadd.f32 %v447, %v562
    %v599 = vadd.f32 %v448, %v564
    %v600 = vadd.f32 %v449, %v568
    %v601 = vadd.f32 %v450, %v570
    %v602 = vadd.f32 %v451, %v572
    %v603 = vadd.f32 %v452, %v574
    %v604 = vadd.f32 %v453, %v578
    %v605 = vadd.f32 %v454, %v580
    %v606 = vadd.f32 %v455, %v582
    %v607 = vadd.f32 %v456, %v584
    %v608 = vadd.f32 %v457, %v588
    %v609 = vadd.f32 %v458, %v590
    %v610 = vadd.f32 %v459, %v592
    %v611 = vadd.f32 %v460, %v594
    %v612 = vld [vmem:[#allocation2 + $0x80] sm:$0xff]
    %v613 = vld [vmem:[#allocation2 + $0x88] sm:$0xff]
    %v614 = vld [vmem:[#allocation2 + $0x90] sm:$0xff]
    %v615 = vld [vmem:[#allocation2 + $0x98] sm:$0x33]
    %vm616 = vcmask 1045504
    %v617 = vrot.slane %v64, 2
    %v618 = vrot.slane %v65, 2
    %v619 = vsel %vm616, %v617, %v618
    %v620 = vrot.slane %v66, 2
    %v621 = vsel %vm616, %v618, %v620
    %v622 = vrot.slane %v67, 2
    %v623 = vsel %vm616, %v620, %v622
    %v624 = vrot.slane %v68, 2
    %v625 = vsel %vm616, %v622, %v624
    %v630 = vunpack.c.l.b16 %v612
    %v631 = vunpack.c.h.b16 %v612
    %v632 = vunpack.c.l.b16 %v613
    %v633 = vunpack.c.h.b16 %v613
    %v634 = vunpack.c.l.b16 %v614
    %v635 = vunpack.c.h.b16 %v614
    %v636 = vunpack.c.l.b16 %v615
    %v637 = vunpack.c.h.b16 %v615
    %v638 = vpack.c.b16 %v632, %v630
    %v639 = vpack.c.b16 %v633, %v631
    %v640 = vpack.c.b16 %v636, %v634
    %v641 = vpack.c.b16 %v637, %v635
    %v645 = vsel %vm124, %v619, 0
    %v648 = vsel %vm124, %v621, 0
    %v651 = vsel %vm124, %v623, 0
    %v654 = vsel %vm124, %v625, 0
    %v657 = vsel %vm137, %v640, 0
    %v660 = vsel %vm137, %v641, 0
    %662 = vmatprep.subr.bf16.mxu0 0
    %663 = vmatpush1.bf16.msra.mxu0 0
    %664 = vmatprep.subr.bf16.mxu0 0
    %665 = vmatpush1.bf16.msra.mxu0 0
    %666 = vmatprep.subr.bf16.mxu0 0
    %667 = vmatpush1.bf16.msra.mxu0 0
    %668 = vmatprep.subr.bf16.mxu0 0
    %669 = vmatpush1.bf16.msra.mxu0 0
    %670 = vmatprep.subr.bf16.mxu0 0
    %671 = vmatpush1.bf16.msra.mxu0 0
    %672 = vmatprep.subr.bf16.mxu0 0
    %673 = vmatpush1.bf16.msra.mxu0 0
    %674 = vmatprep.subr.bf16.mxu0 %v660
    %675 = vmatpush1.bf16.msra.mxu0 %v657
    %676 = vmatprep.subr.bf16.mxu0 %v639
    %677 = vmatpush1.bf16.msra.mxu0 %v638
    %678 = vmatprep.subr.bf16.mxu0 0
    %679 = vmatpush2.bf16.msra.mxu0 0
    %680 = vmatprep.subr.bf16.mxu0 0
    %681 = vmatpush2.bf16.msra.mxu0 0
    %682 = vmatprep.subr.bf16.mxu0 0
    %683 = vmatpush2.bf16.msra.mxu0 0
    %684 = vmatprep.subr.bf16.mxu0 0
    %685 = vmatpush2.bf16.msra.mxu0 0
    %686 = vmatprep.subr.bf16.mxu0 0
    %687 = vmatpush2.bf16.msra.mxu0 0
    %688 = vmatprep.subr.bf16.mxu0 0
    %689 = vmatpush2.bf16.msra.mxu0 0
    %690 = vmatprep.subr.bf16.mxu0 0
    %691 = vmatpush2.bf16.msra.mxu0 0
    %692 = vmatprep.subr.bf16.mxu0 0
    %693 = vmatpush2.bf16.msra.mxu0 0
    %694 = vmatprep.mubr.bf16.mxu0 0
    %695 = vmatmul.mubr.bf16.gmra.mxu0 %v645
    %v696 = vpop.f32.mrf.mxu0
    %v697 = vadd.f32 0.0, %v696
    %v698 = vpop.f32.mrf.mxu0
    %v699 = vadd.f32 0.0, %v698
    %v700 = vpop.f32.mrf.mxu0
    %v701 = vadd.f32 0.0, %v700
    %v702 = vpop.f32.mrf.mxu0
    %v703 = vadd.f32 0.0, %v702
    %704 = vmatprep.mubr.bf16.mxu0 0
    %705 = vmatmul.mubr.bf16.gmra.mxu0 %v648
    %v706 = vpop.f32.mrf.mxu0
    %v707 = vadd.f32 0.0, %v706
    %v708 = vpop.f32.mrf.mxu0
    %v709 = vadd.f32 0.0, %v708
    %v710 = vpop.f32.mrf.mxu0
    %v711 = vadd.f32 0.0, %v710
    %v712 = vpop.f32.mrf.mxu0
    %v713 = vadd.f32 0.0, %v712
    %714 = vmatprep.mubr.bf16.mxu0 0
    %715 = vmatmul.mubr.bf16.gmra.mxu0 %v651
    %v716 = vpop.f32.mrf.mxu0
    %v717 = vadd.f32 0.0, %v716
    %v718 = vpop.f32.mrf.mxu0
    %v719 = vadd.f32 0.0, %v718
    %v720 = vpop.f32.mrf.mxu0
    %v721 = vadd.f32 0.0, %v720
    %v722 = vpop.f32.mrf.mxu0
    %v723 = vadd.f32 0.0, %v722
    %724 = vmatprep.mubr.bf16.mxu0 0
    %725 = vmatmul.mubr.bf16.gmra.mxu0 %v654
    %v726 = vpop.f32.mrf.mxu0
    %v727 = vadd.f32 0.0, %v726
    %v728 = vpop.f32.mrf.mxu0
    %v729 = vadd.f32 0.0, %v728
    %v730 = vpop.f32.mrf.mxu0
    %v731 = vadd.f32 0.0, %v730
    %v732 = vpop.f32.mrf.mxu0
    %v733 = vadd.f32 0.0, %v732
    %734 = vdwg.mxu0
    %v735 = vadd.f32 %v596, %v697
    %v736 = vadd.f32 %v597, %v699
    %v737 = vadd.f32 %v598, %v701
    %v738 = vadd.f32 %v599, %v703
    %v739 = vadd.f32 %v600, %v707
    %v740 = vadd.f32 %v601, %v709
    %v741 = vadd.f32 %v602, %v711
    %v742 = vadd.f32 %v603, %v713
    %v743 = vadd.f32 %v604, %v717
    %v744 = vadd.f32 %v605, %v719
    %v745 = vadd.f32 %v606, %v721
    %v746 = vadd.f32 %v607, %v723
    %v747 = vadd.f32 %v608, %v727
    %v748 = vadd.f32 %v609, %v729
    %v749 = vadd.f32 %v610, %v731
    %v750 = vadd.f32 %v611, %v733
    %v751 = vld [vmem:[#allocation2 + $0xa0] sm:$0x11]
    %v752 = vunpack.c.l.bf16 %v751
    %v753 = vunpack.c.h.bf16 %v751
    %v754 = vlaneseq
    %v755 = vshrl.u32 %v754, 7
    %v756 = vsub.s32 0, %v755
    %v757 = vrot.slane %v752, %v756
    %v758 = vlaneseq
    %v759 = vshrl.u32 %v758, 7
    %v760 = vsub.s32 0, %v759
    %v761 = vrot.slane %v753, %v760
    %v762 = vadd.f32 %v735, %v757
    %v763 = vadd.f32 %v736, %v761
    %v764 = vadd.f32 %v737, %v757
    %v765 = vadd.f32 %v738, %v761
    %v766 = vadd.f32 %v739, %v757
    %v767 = vadd.f32 %v740, %v761
    %v768 = vadd.f32 %v741, %v757
    %v769 = vadd.f32 %v742, %v761
    %v770 = vadd.f32 %v743, %v757
    %v771 = vadd.f32 %v744, %v761
    %v772 = vadd.f32 %v745, %v757
    %v773 = vadd.f32 %v746, %v761
    %v774 = vadd.f32 %v747, %v757
    %v775 = vadd.f32 %v748, %v761
    %v776 = vadd.f32 %v749, %v757
    %v777 = vadd.f32 %v750, %v761
    %v778 = vmax.f32 %v762, 0.0
    %v779 = vmax.f32 %v763, 0.0
    %v780 = vmax.f32 %v764, 0.0
    %v781 = vmax.f32 %v765, 0.0
    %v782 = vmax.f32 %v766, 0.0
    %v783 = vmax.f32 %v767, 0.0
    %v784 = vmax.f32 %v768, 0.0
    %v785 = vmax.f32 %v769, 0.0
    %v786 = vmax.f32 %v770, 0.0
    %v787 = vmax.f32 %v771, 0.0
    %v788 = vmax.f32 %v772, 0.0
    %v789 = vmax.f32 %v773, 0.0
    %v790 = vmax.f32 %v774, 0.0
    %v791 = vmax.f32 %v775, 0.0
    %v792 = vmax.f32 %v776, 0.0
    %v793 = vmax.f32 %v777, 0.0
    %v794 = vmax.f32 %v778, %v779
    %v795 = vmax.f32 %v780, %v781
    %v796 = vmax.f32 %v782, %v783
    %v797 = vmax.f32 %v784, %v785
    %v798 = vmax.f32 %v786, %v787
    %v799 = vmax.f32 %v788, %v789
    %v800 = vmax.f32 %v790, %v791
    %v801 = vmax.f32 %v792, %v793
    %v810 = vcombine.high %v794, %v794
    %v812 = vunpack.c.l.s4 1983009808
    %v813 = vunpack.c.0.s8 %v812
    %v814 = vlaneseq
    %v815 = vshrl.u32 %v814, 7
    %v816 = vsub.s32 %v813, %v815
    %v817 = vrot.slane %v794, %v816
    %v819 = vunpack.c.l.s4 1983009808
    %v820 = vunpack.c.0.s8 %v819
    %v821 = vlaneseq
    %v822 = vshrl.u32 %v821, 7
    %v823 = vsub.s32 %v820, %v822
    %v824 = vrot.slane %v810, %v823
    %v825 = vcombine.high %v817, %v817
    %v826 = vcombine.high %v824, %v824
    %v827 = vcombine.high %v795, %v795
    %v829 = vunpack.c.l.s4 1983009808
    %v830 = vunpack.c.0.s8 %v829
    %v831 = vlaneseq
    %v832 = vshrl.u32 %v831, 7
    %v833 = vsub.s32 %v830, %v832
    %v834 = vrot.slane %v795, %v833
    %v836 = vunpack.c.l.s4 1983009808
    %v837 = vunpack.c.0.s8 %v836
    %v838 = vlaneseq
    %v839 = vshrl.u32 %v838, 7
    %v840 = vsub.s32 %v837, %v839
    %v841 = vrot.slane %v827, %v840
    %v842 = vcombine.high %v834, %v834
    %v843 = vcombine.high %v841, %v841
    %v844 = vcombine.high %v796, %v796
    %v846 = vunpack.c.l.s4 1983009808
    %v847 = vunpack.c.0.s8 %v846
    %v848 = vlaneseq
    %v849 = vshrl.u32 %v848, 7
    %v850 = vsub.s32 %v847, %v849
    %v851 = vrot.slane %v796, %v850
    %v853 = vunpack.c.l.s4 1983009808
    %v854 = vunpack.c.0.s8 %v853
    %v855 = vlaneseq
    %v856 = vshrl.u32 %v855, 7
    %v857 = vsub.s32 %v854, %v856
    %v858 = vrot.slane %v844, %v857
    %v859 = vcombine.high %v851, %v851
    %v860 = vcombine.high %v858, %v858
    %v861 = vcombine.high %v797, %v797
    %v863 = vunpack.c.l.s4 1983009808
    %v864 = vunpack.c.0.s8 %v863
    %v865 = vlaneseq
    %v866 = vshrl.u32 %v865, 7
    %v867 = vsub.s32 %v864, %v866
    %v868 = vrot.slane %v797, %v867
    %v870 = vunpack.c.l.s4 1983009808
    %v871 = vunpack.c.0.s8 %v870
    %v872 = vlaneseq
    %v873 = vshrl.u32 %v872, 7
    %v874 = vsub.s32 %v871, %v873
    %v875 = vrot.slane %v861, %v874
    %v876 = vcombine.high %v868, %v868
    %v877 = vcombine.high %v875, %v875
    %v878 = vcombine.high %v798, %v798
    %v880 = vunpack.c.l.s4 1983009808
    %v881 = vunpack.c.0.s8 %v880
    %v882 = vlaneseq
    %v883 = vshrl.u32 %v882, 7
    %v884 = vsub.s32 %v881, %v883
    %v885 = vrot.slane %v798, %v884
    %v887 = vunpack.c.l.s4 1983009808
    %v888 = vunpack.c.0.s8 %v887
    %v889 = vlaneseq
    %v890 = vshrl.u32 %v889, 7
    %v891 = vsub.s32 %v888, %v890
    %v892 = vrot.slane %v878, %v891
    %v893 = vcombine.high %v885, %v885
    %v894 = vcombine.high %v892, %v892
    %v895 = vcombine.high %v799, %v799
    %v897 = vunpack.c.l.s4 1983009808
    %v898 = vunpack.c.0.s8 %v897
    %v899 = vlaneseq
    %v900 = vshrl.u32 %v899, 7
    %v901 = vsub.s32 %v898, %v900
    %v902 = vrot.slane %v799, %v901
    %v904 = vunpack.c.l.s4 1983009808
    %v905 = vunpack.c.0.s8 %v904
    %v906 = vlaneseq
    %v907 = vshrl.u32 %v906, 7
    %v908 = vsub.s32 %v905, %v907
    %v909 = vrot.slane %v895, %v908
    %v910 = vcombine.high %v902, %v902
    %v911 = vcombine.high %v909, %v909
    %v912 = vcombine.high %v800, %v800
    %v914 = vunpack.c.l.s4 1983009808
    %v915 = vunpack.c.0.s8 %v914
    %v916 = vlaneseq
    %v917 = vshrl.u32 %v916, 7
    %v918 = vsub.s32 %v915, %v917
    %v919 = vrot.slane %v800, %v918
    %v921 = vunpack.c.l.s4 1983009808
    %v922 = vunpack.c.0.s8 %v921
    %v923 = vlaneseq
    %v924 = vshrl.u32 %v923, 7
    %v925 = vsub.s32 %v922, %v924
    %v926 = vrot.slane %v912, %v925
    %v927 = vcombine.high %v919, %v919
    %v928 = vcombine.high %v926, %v926
    %v929 = vcombine.high %v801, %v801
    %v931 = vunpack.c.l.s4 1983009808
    %v932 = vunpack.c.0.s8 %v931
    %v933 = vlaneseq
    %v934 = vshrl.u32 %v933, 7
    %v935 = vsub.s32 %v932, %v934
    %v936 = vrot.slane %v801, %v935
    %v938 = vunpack.c.l.s4 1983009808
    %v939 = vunpack.c.0.s8 %v938
    %v940 = vlaneseq
    %v941 = vshrl.u32 %v940, 7
    %v942 = vsub.s32 %v939, %v941
    %v943 = vrot.slane %v929, %v942
    %v944 = vcombine.high %v936, %v936
    %v945 = vcombine.high %v943, %v943
    %vm978 = vcmask 1041408
    %v979 = vsel %vm978, %v817, -inf
    %v980 = vrot.slane %v979, 4
    %v981 = vmax.f32 %v979, %v980
    %v982 = vrot.slane %v981, 2
    %v983 = vmax.f32 %v981, %v982
    %v984 = vrot.slane %v983, 1
    %v985 = vmax.f32 %v983, %v984
    %v986 = vsel %vm978, %v825, -inf
    %v987 = vrot.slane %v986, 4
    %v988 = vmax.f32 %v986, %v987
    %v989 = vrot.slane %v988, 2
    %v990 = vmax.f32 %v988, %v989
    %v991 = vrot.slane %v990, 1
    %v992 = vmax.f32 %v990, %v991
    %v993 = vsel %vm978, %v824, -inf
    %v994 = vrot.slane %v993, 4
    %v995 = vmax.f32 %v993, %v994
    %v996 = vrot.slane %v995, 2
    %v997 = vmax.f32 %v995, %v996
    %v998 = vrot.slane %v997, 1
    %v999 = vmax.f32 %v997, %v998
    %v1000 = vsel %vm978, %v826, -inf
    %v1001 = vrot.slane %v1000, 4
    %v1002 = vmax.f32 %v1000, %v1001
    %v1003 = vrot.slane %v1002, 2
    %v1004 = vmax.f32 %v1002, %v1003
    %v1005 = vrot.slane %v1004, 1
    %v1006 = vmax.f32 %v1004, %v1005
    %v1007 = vsel %vm978, %v834, -inf
    %v1008 = vrot.slane %v1007, 4
    %v1009 = vmax.f32 %v1007, %v1008
    %v1010 = vrot.slane %v1009, 2
    %v1011 = vmax.f32 %v1009, %v1010
    %v1012 = vrot.slane %v1011, 1
    %v1013 = vmax.f32 %v1011, %v1012
    %v1014 = vsel %vm978, %v842, -inf
    %v1015 = vrot.slane %v1014, 4
    %v1016 = vmax.f32 %v1014, %v1015
    %v1017 = vrot.slane %v1016, 2
    %v1018 = vmax.f32 %v1016, %v1017
    %v1019 = vrot.slane %v1018, 1
    %v1020 = vmax.f32 %v1018, %v1019
    %v1021 = vsel %vm978, %v841, -inf
    %v1022 = vrot.slane %v1021, 4
    %v1023 = vmax.f32 %v1021, %v1022
    %v1024 = vrot.slane %v1023, 2
    %v1025 = vmax.f32 %v1023, %v1024
    %v1026 = vrot.slane %v1025, 1
    %v1027 = vmax.f32 %v1025, %v1026
    %v1028 = vsel %vm978, %v843, -inf
    %v1029 = vrot.slane %v1028, 4
    %v1030 = vmax.f32 %v1028, %v1029
    %v1031 = vrot.slane %v1030, 2
    %v1032 = vmax.f32 %v1030, %v1031
    %v1033 = vrot.slane %v1032, 1
    %v1034 = vmax.f32 %v1032, %v1033
    %v1035 = vsel %vm978, %v851, -inf
    %v1036 = vrot.slane %v1035, 4
    %v1037 = vmax.f32 %v1035, %v1036
    %v1038 = vrot.slane %v1037, 2
    %v1039 = vmax.f32 %v1037, %v1038
    %v1040 = vrot.slane %v1039, 1
    %v1041 = vmax.f32 %v1039, %v1040
    %v1042 = vsel %vm978, %v859, -inf
    %v1043 = vrot.slane %v1042, 4
    %v1044 = vmax.f32 %v1042, %v1043
    %v1045 = vrot.slane %v1044, 2
    %v1046 = vmax.f32 %v1044, %v1045
    %v1047 = vrot.slane %v1046, 1
    %v1048 = vmax.f32 %v1046, %v1047
    %v1049 = vsel %vm978, %v858, -inf
    %v1050 = vrot.slane %v1049, 4
    %v1051 = vmax.f32 %v1049, %v1050
    %v1052 = vrot.slane %v1051, 2
    %v1053 = vmax.f32 %v1051, %v1052
    %v1054 = vrot.slane %v1053, 1
    %v1055 = vmax.f32 %v1053, %v1054
    %v1056 = vsel %vm978, %v860, -inf
    %v1057 = vrot.slane %v1056, 4
    %v1058 = vmax.f32 %v1056, %v1057
    %v1059 = vrot.slane %v1058, 2
    %v1060 = vmax.f32 %v1058, %v1059
    %v1061 = vrot.slane %v1060, 1
    %v1062 = vmax.f32 %v1060, %v1061
    %v1063 = vsel %vm978, %v868, -inf
    %v1064 = vrot.slane %v1063, 4
    %v1065 = vmax.f32 %v1063, %v1064
    %v1066 = vrot.slane %v1065, 2
    %v1067 = vmax.f32 %v1065, %v1066
    %v1068 = vrot.slane %v1067, 1
    %v1069 = vmax.f32 %v1067, %v1068
    %v1070 = vsel %vm978, %v876, -inf
    %v1071 = vrot.slane %v1070, 4
    %v1072 = vmax.f32 %v1070, %v1071
    %v1073 = vrot.slane %v1072, 2
    %v1074 = vmax.f32 %v1072, %v1073
    %v1075 = vrot.slane %v1074, 1
    %v1076 = vmax.f32 %v1074, %v1075
    %v1077 = vsel %vm978, %v875, -inf
    %v1078 = vrot.slane %v1077, 4
    %v1079 = vmax.f32 %v1077, %v1078
    %v1080 = vrot.slane %v1079, 2
    %v1081 = vmax.f32 %v1079, %v1080
    %v1082 = vrot.slane %v1081, 1
    %v1083 = vmax.f32 %v1081, %v1082
    %v1084 = vsel %vm978, %v877, -inf
    %v1085 = vrot.slane %v1084, 4
    %v1086 = vmax.f32 %v1084, %v1085
    %v1087 = vrot.slane %v1086, 2
    %v1088 = vmax.f32 %v1086, %v1087
    %v1089 = vrot.slane %v1088, 1
    %v1090 = vmax.f32 %v1088, %v1089
    %v1091 = vsel %vm978, %v885, -inf
    %v1092 = vrot.slane %v1091, 4
    %v1093 = vmax.f32 %v1091, %v1092
    %v1094 = vrot.slane %v1093, 2
    %v1095 = vmax.f32 %v1093, %v1094
    %v1096 = vrot.slane %v1095, 1
    %v1097 = vmax.f32 %v1095, %v1096
    %v1098 = vsel %vm978, %v893, -inf
    %v1099 = vrot.slane %v1098, 4
    %v1100 = vmax.f32 %v1098, %v1099
    %v1101 = vrot.slane %v1100, 2
    %v1102 = vmax.f32 %v1100, %v1101
    %v1103 = vrot.slane %v1102, 1
    %v1104 = vmax.f32 %v1102, %v1103
    %v1105 = vsel %vm978, %v892, -inf
    %v1106 = vrot.slane %v1105, 4
    %v1107 = vmax.f32 %v1105, %v1106
    %v1108 = vrot.slane %v1107, 2
    %v1109 = vmax.f32 %v1107, %v1108
    %v1110 = vrot.slane %v1109, 1
    %v1111 = vmax.f32 %v1109, %v1110
    %v1112 = vsel %vm978, %v894, -inf
    %v1113 = vrot.slane %v1112, 4
    %v1114 = vmax.f32 %v1112, %v1113
    %v1115 = vrot.slane %v1114, 2
    %v1116 = vmax.f32 %v1114, %v1115
    %v1117 = vrot.slane %v1116, 1
    %v1118 = vmax.f32 %v1116, %v1117
    %v1119 = vsel %vm978, %v902, -inf
    %v1120 = vrot.slane %v1119, 4
    %v1121 = vmax.f32 %v1119, %v1120
    %v1122 = vrot.slane %v1121, 2
    %v1123 = vmax.f32 %v1121, %v1122
    %v1124 = vrot.slane %v1123, 1
    %v1125 = vmax.f32 %v1123, %v1124
    %v1126 = vsel %vm978, %v910, -inf
    %v1127 = vrot.slane %v1126, 4
    %v1128 = vmax.f32 %v1126, %v1127
    %v1129 = vrot.slane %v1128, 2
    %v1130 = vmax.f32 %v1128, %v1129
    %v1131 = vrot.slane %v1130, 1
    %v1132 = vmax.f32 %v1130, %v1131
    %v1133 = vsel %vm978, %v909, -inf
    %v1134 = vrot.slane %v1133, 4
    %v1135 = vmax.f32 %v1133, %v1134
    %v1136 = vrot.slane %v1135, 2
    %v1137 = vmax.f32 %v1135, %v1136
    %v1138 = vrot.slane %v1137, 1
    %v1139 = vmax.f32 %v1137, %v1138
    %v1140 = vsel %vm978, %v911, -inf
    %v1141 = vrot.slane %v1140, 4
    %v1142 = vmax.f32 %v1140, %v1141
    %v1143 = vrot.slane %v1142, 2
    %v1144 = vmax.f32 %v1142, %v1143
    %v1145 = vrot.slane %v1144, 1
    %v1146 = vmax.f32 %v1144, %v1145
    %v1147 = vsel %vm978, %v919, -inf
    %v1148 = vrot.slane %v1147, 4
    %v1149 = vmax.f32 %v1147, %v1148
    %v1150 = vrot.slane %v1149, 2
    %v1151 = vmax.f32 %v1149, %v1150
    %v1152 = vrot.slane %v1151, 1
    %v1153 = vmax.f32 %v1151, %v1152
    %v1154 = vsel %vm978, %v927, -inf
    %v1155 = vrot.slane %v1154, 4
    %v1156 = vmax.f32 %v1154, %v1155
    %v1157 = vrot.slane %v1156, 2
    %v1158 = vmax.f32 %v1156, %v1157
    %v1159 = vrot.slane %v1158, 1
    %v1160 = vmax.f32 %v1158, %v1159
    %v1161 = vsel %vm978, %v926, -inf
    %v1162 = vrot.slane %v1161, 4
    %v1163 = vmax.f32 %v1161, %v1162
    %v1164 = vrot.slane %v1163, 2
    %v1165 = vmax.f32 %v1163, %v1164
    %v1166 = vrot.slane %v1165, 1
    %v1167 = vmax.f32 %v1165, %v1166
    %v1168 = vsel %vm978, %v928, -inf
    %v1169 = vrot.slane %v1168, 4
    %v1170 = vmax.f32 %v1168, %v1169
    %v1171 = vrot.slane %v1170, 2
    %v1172 = vmax.f32 %v1170, %v1171
    %v1173 = vrot.slane %v1172, 1
    %v1174 = vmax.f32 %v1172, %v1173
    %v1175 = vsel %vm978, %v936, -inf
    %v1176 = vrot.slane %v1175, 4
    %v1177 = vmax.f32 %v1175, %v1176
    %v1178 = vrot.slane %v1177, 2
    %v1179 = vmax.f32 %v1177, %v1178
    %v1180 = vrot.slane %v1179, 1
    %v1181 = vmax.f32 %v1179, %v1180
    %v1182 = vsel %vm978, %v944, -inf
    %v1183 = vrot.slane %v1182, 4
    %v1184 = vmax.f32 %v1182, %v1183
    %v1185 = vrot.slane %v1184, 2
    %v1186 = vmax.f32 %v1184, %v1185
    %v1187 = vrot.slane %v1186, 1
    %v1188 = vmax.f32 %v1186, %v1187
    %v1189 = vsel %vm978, %v943, -inf
    %v1190 = vrot.slane %v1189, 4
    %v1191 = vmax.f32 %v1189, %v1190
    %v1192 = vrot.slane %v1191, 2
    %v1193 = vmax.f32 %v1191, %v1192
    %v1194 = vrot.slane %v1193, 1
    %v1195 = vmax.f32 %v1193, %v1194
    %v1196 = vsel %vm978, %v945, -inf
    %v1197 = vrot.slane %v1196, 4
    %v1198 = vmax.f32 %v1196, %v1197
    %v1199 = vrot.slane %v1198, 2
    %v1200 = vmax.f32 %v1198, %v1199
    %v1201 = vrot.slane %v1200, 1
    %v1202 = vmax.f32 %v1200, %v1201
    %vm1235 = vcmask 1041409
    %v1236 = vsel %vm1235, %v992, %v985
    %vm1237 = vcmask 1042434
    %v1238 = vsel %vm1237, %v999, %v1236
    %vm1239 = vcmask 1043459
    %v1240 = vsel %vm1239, %v1006, %v1238
    %vm1241 = vcmask 1044484
    %v1242 = vsel %vm1241, %v1013, %v1240
    %vm1243 = vcmask 1045509
    %v1244 = vsel %vm1243, %v1020, %v1242
    %vm1245 = vcmask 1046534
    %v1246 = vsel %vm1245, %v1027, %v1244
    %vm1247 = vcmask 1047559
    %v1248 = vsel %vm1247, %v1034, %v1246
    %v1249 = vsel %vm1235, %v1048, %v1041
    %v1250 = vsel %vm1237, %v1055, %v1249
    %v1251 = vsel %vm1239, %v1062, %v1250
    %v1252 = vsel %vm1241, %v1069, %v1251
    %v1253 = vsel %vm1243, %v1076, %v1252
    %v1254 = vsel %vm1245, %v1083, %v1253
    %v1255 = vsel %vm1247, %v1090, %v1254
    %v1256 = vsel %vm1235, %v1104, %v1097
    %v1257 = vsel %vm1237, %v1111, %v1256
    %v1258 = vsel %vm1239, %v1118, %v1257
    %v1259 = vsel %vm1241, %v1125, %v1258
    %v1260 = vsel %vm1243, %v1132, %v1259
    %v1261 = vsel %vm1245, %v1139, %v1260
    %v1262 = vsel %vm1247, %v1146, %v1261
    %v1263 = vsel %vm1235, %v1160, %v1153
    %v1264 = vsel %vm1237, %v1167, %v1263
    %v1265 = vsel %vm1239, %v1174, %v1264
    %v1266 = vsel %vm1241, %v1181, %v1265
    %v1267 = vsel %vm1243, %v1188, %v1266
    %v1268 = vsel %vm1245, %v1195, %v1267
    %v1269 = vsel %vm1247, %v1202, %v1268
    %v1274 = vpack.c.bf16 %v1255, %v1248
    %v1275 = vpack.c.bf16 %v1269, %v1262
    %v1276 = vpack.c.bf16 0.0, 0.0
    %v1277 = vld [vmem:[#allocation2 + $0xa8] sm:$0xff]
    %v1278 = vld [vmem:[#allocation2 + $0xb0] sm:$0xff]
    %v1279 = vld [vmem:[#allocation2 + $0xb8] sm:$0xff]
    %v1280 = vld [vmem:[#allocation2 + $0xc0] sm:$0xff]
    %v1281 = vld [vmem:[#allocation2 + $0xc8] sm:$0xff]
    %v1282 = vld [vmem:[#allocation2 + $0xd0] sm:$0xff]
    %v1283 = vld [vmem:[#allocation2 + $0xd8] sm:$0xff]
    %v1284 = vld [vmem:[#allocation2 + $0xe0] sm:$0xff]
    %v1285 = vld [vmem:[#allocation2 + $0xe8] sm:$0xff]
    %v1286 = vld [vmem:[#allocation2 + $0xf0] sm:$0xff]
    %v1287 = vld [vmem:[#allocation2 + $0xf8] sm:$0xff]
    %v1288 = vld [vmem:[#allocation2 + $0x100] sm:$0xff]
    %v1289 = vld [vmem:[#allocation2 + $0x108] sm:$0xff]
    %v1290 = vld [vmem:[#allocation2 + $0x110] sm:$0xff]
    %v1291 = vld [vmem:[#allocation2 + $0x118] sm:$0xff]
    %v1292 = vld [vmem:[#allocation2 + $0x120] sm:$0xff]
    %v1293 = vld [vmem:[#allocation2 + $0x128] sm:$0xff]
    %v1294 = vld [vmem:[#allocation2 + $0x130] sm:$0xff]
    %v1295 = vld [vmem:[#allocation2 + $0x138] sm:$0xff]
    %v1296 = vld [vmem:[#allocation2 + $0x140] sm:$0xff]
    %v1297 = vld [vmem:[#allocation2 + $0x148] sm:$0xff]
    %v1298 = vld [vmem:[#allocation2 + $0x150] sm:$0xff]
    %v1299 = vld [vmem:[#allocation2 + $0x158] sm:$0xff]
    %v1300 = vld [vmem:[#allocation2 + $0x160] sm:$0xff]
    %v1301 = vld [vmem:[#allocation2 + $0x168] sm:$0xff]
    %v1302 = vld [vmem:[#allocation2 + $0x170] sm:$0xff]
    %v1303 = vld [vmem:[#allocation2 + $0x178] sm:$0xff]
    %v1304 = vld [vmem:[#allocation2 + $0x180] sm:$0xff]
    %v1305 = vld [vmem:[#allocation2 + $0x188] sm:$0xff]
    %v1306 = vld [vmem:[#allocation2 + $0x190] sm:$0xff]
    %v1307 = vld [vmem:[#allocation2 + $0x198] sm:$0xff]
    %v1308 = vld [vmem:[#allocation2 + $0x1a0] sm:$0xff]
    %v1310 = vshrl.u32 %v1274, 16
    %v1312 = vshll.u32 %v1274, 16
    %v1314 = vrot.slane %v1312, 1
    %v1315 = vor.u32 %v1310, %v1314
    %v1317 = vshll.u32 %v1275, 16
    %v1319 = vrot.slane %v1317, 1
    %v1320 = vsel %vm69, %v1315, %v1319
    %v1321 = vshrl.u32 %v1275, 16
    %v1323 = vor.u32 %v1321, %v1319
    %v1325 = vshll.u32 %v1276, 16
    %v1327 = vrot.slane %v1325, 1
    %v1328 = vsel %vm69, %v1323, %v1327
    %v1347 = vunpack.c.l.b16 %v1293
    %v1348 = vunpack.c.h.b16 %v1293
    %v1349 = vunpack.c.l.b16 %v1294
    %v1350 = vunpack.c.h.b16 %v1294
    %v1351 = vunpack.c.l.b16 %v1295
    %v1352 = vunpack.c.h.b16 %v1295
    %v1353 = vunpack.c.l.b16 %v1296
    %v1354 = vunpack.c.h.b16 %v1296
    %v1355 = vunpack.c.l.b16 %v1297
    %v1356 = vunpack.c.h.b16 %v1297
    %v1357 = vunpack.c.l.b16 %v1298
    %v1358 = vunpack.c.h.b16 %v1298
    %v1359 = vunpack.c.l.b16 %v1299
    %v1360 = vunpack.c.h.b16 %v1299
    %v1361 = vunpack.c.l.b16 %v1300
    %v1362 = vunpack.c.h.b16 %v1300
    %v1363 = vunpack.c.l.b16 %v1301
    %v1364 = vunpack.c.h.b16 %v1301
    %v1365 = vunpack.c.l.b16 %v1302
    %v1366 = vunpack.c.h.b16 %v1302
    %v1367 = vunpack.c.l.b16 %v1303
    %v1368 = vunpack.c.h.b16 %v1303
    %v1369 = vunpack.c.l.b16 %v1304
    %v1370 = vunpack.c.h.b16 %v1304
    %v1371 = vunpack.c.l.b16 %v1305
    %v1372 = vunpack.c.h.b16 %v1305
    %v1373 = vunpack.c.l.b16 %v1306
    %v1374 = vunpack.c.h.b16 %v1306
    %v1375 = vunpack.c.l.b16 %v1307
    %v1376 = vunpack.c.h.b16 %v1307
    %v1377 = vunpack.c.l.b16 %v1308
    %v1378 = vunpack.c.h.b16 %v1308
    %v1379 = vpack.c.b16 %v1349, %v1347
    %v1380 = vpack.c.b16 %v1350, %v1348
    %v1381 = vpack.c.b16 %v1353, %v1351
    %v1382 = vpack.c.b16 %v1354, %v1352
    %v1383 = vpack.c.b16 %v1357, %v1355
    %v1384 = vpack.c.b16 %v1358, %v1356
    %v1385 = vpack.c.b16 %v1361, %v1359
    %v1386 = vpack.c.b16 %v1362, %v1360
    %v1387 = vpack.c.b16 %v1365, %v1363
    %v1388 = vpack.c.b16 %v1366, %v1364
    %v1389 = vpack.c.b16 %v1369, %v1367
    %v1390 = vpack.c.b16 %v1370, %v1368
    %v1391 = vpack.c.b16 %v1373, %v1371
    %v1392 = vpack.c.b16 %v1374, %v1372
    %v1393 = vpack.c.b16 %v1377, %v1375
    %v1394 = vpack.c.b16 %v1378, %v1376
    %1411 = vmatprep.subr.bf16.mxu0 %v1394
    %1412 = vmatpush1.bf16.msra.mxu0 %v1393
    %1413 = vmatprep.subr.bf16.mxu0 %v1392
    %1414 = vmatpush1.bf16.msra.mxu0 %v1391
    %1415 = vmatprep.subr.bf16.mxu0 %v1390
    %1416 = vmatpush1.bf16.msra.mxu0 %v1389
    %1417 = vmatprep.subr.bf16.mxu0 %v1388
    %1418 = vmatpush1.bf16.msra.mxu0 %v1387
    %1419 = vmatprep.subr.bf16.mxu0 %v1386
    %1420 = vmatpush1.bf16.msra.mxu0 %v1385
    %1421 = vmatprep.subr.bf16.mxu0 %v1384
    %1422 = vmatpush1.bf16.msra.mxu0 %v1383
    %1423 = vmatprep.subr.bf16.mxu0 %v1382
    %1424 = vmatpush1.bf16.msra.mxu0 %v1381
    %1425 = vmatprep.subr.bf16.mxu0 %v1380
    %1426 = vmatpush1.bf16.msra.mxu0 %v1379
    %1427 = vmatprep.subr.bf16.mxu0 0
    %1428 = vmatpush2.bf16.msra.mxu0 0
    %1429 = vmatprep.subr.bf16.mxu0 0
    %1430 = vmatpush2.bf16.msra.mxu0 0
    %1431 = vmatprep.subr.bf16.mxu0 0
    %1432 = vmatpush2.bf16.msra.mxu0 0
    %1433 = vmatprep.subr.bf16.mxu0 0
    %1434 = vmatpush2.bf16.msra.mxu0 0
    %1435 = vmatprep.subr.bf16.mxu0 0
    %1436 = vmatpush2.bf16.msra.mxu0 0
    %1437 = vmatprep.subr.bf16.mxu0 0
    %1438 = vmatpush2.bf16.msra.mxu0 0
    %1439 = vmatprep.subr.bf16.mxu0 0
    %1440 = vmatpush2.bf16.msra.mxu0 0
    %1441 = vmatprep.subr.bf16.mxu0 0
    %1442 = vmatpush2.bf16.msra.mxu0 0
    %1443 = vmatprep.mubr.bf16.mxu0 0
    %1444 = vmatmul.mubr.bf16.gmra.mxu0 %v1320
    %v1445 = vpop.f32.mrf.mxu0
    %v1446 = vadd.f32 0.0, %v1445
    %v1447 = vpop.f32.mrf.mxu0
    %v1448 = vadd.f32 0.0, %v1447
    %v1449 = vpop.f32.mrf.mxu0
    %v1450 = vadd.f32 0.0, %v1449
    %v1451 = vpop.f32.mrf.mxu0
    %v1452 = vadd.f32 0.0, %v1451
    %1453 = vmatprep.mubr.bf16.mxu0 0
    %1454 = vmatmul.mubr.bf16.gmra.mxu0 %v1328
    %v1455 = vpop.f32.mrf.mxu0
    %v1456 = vadd.f32 0.0, %v1455
    %v1457 = vpop.f32.mrf.mxu0
    %v1458 = vadd.f32 0.0, %v1457
    %v1459 = vpop.f32.mrf.mxu0
    %v1460 = vadd.f32 0.0, %v1459
    %v1461 = vpop.f32.mrf.mxu0
    %v1462 = vadd.f32 0.0, %v1461
    %1463 = vdwg.mxu0
    %v1480 = vunpack.c.l.b16 %v1277
    %v1481 = vunpack.c.h.b16 %v1277
    %v1482 = vunpack.c.l.b16 %v1278
    %v1483 = vunpack.c.h.b16 %v1278
    %v1484 = vunpack.c.l.b16 %v1279
    %v1485 = vunpack.c.h.b16 %v1279
    %v1486 = vunpack.c.l.b16 %v1280
    %v1487 = vunpack.c.h.b16 %v1280
    %v1488 = vunpack.c.l.b16 %v1281
    %v1489 = vunpack.c.h.b16 %v1281
    %v1490 = vunpack.c.l.b16 %v1282
    %v1491 = vunpack.c.h.b16 %v1282
    %v1492 = vunpack.c.l.b16 %v1283
    %v1493 = vunpack.c.h.b16 %v1283
    %v1494 = vunpack.c.l.b16 %v1284
    %v1495 = vunpack.c.h.b16 %v1284
    %v1496 = vunpack.c.l.b16 %v1285
    %v1497 = vunpack.c.h.b16 %v1285
    %v1498 = vunpack.c.l.b16 %v1286
    %v1499 = vunpack.c.h.b16 %v1286
    %v1500 = vunpack.c.l.b16 %v1287
    %v1501 = vunpack.c.h.b16 %v1287
    %v1502 = vunpack.c.l.b16 %v1288
    %v1503 = vunpack.c.h.b16 %v1288
    %v1504 = vunpack.c.l.b16 %v1289
    %v1505 = vunpack.c.h.b16 %v1289
    %v1506 = vunpack.c.l.b16 %v1290
    %v1507 = vunpack.c.h.b16 %v1290
    %v1508 = vunpack.c.l.b16 %v1291
    %v1509 = vunpack.c.h.b16 %v1291
    %v1510 = vunpack.c.l.b16 %v1292
    %v1511 = vunpack.c.h.b16 %v1292
    %v1512 = vpack.c.b16 %v1482, %v1480
    %v1513 = vpack.c.b16 %v1483, %v1481
    %v1514 = vpack.c.b16 %v1486, %v1484
    %v1515 = vpack.c.b16 %v1487, %v1485
    %v1516 = vpack.c.b16 %v1490, %v1488
    %v1517 = vpack.c.b16 %v1491, %v1489
    %v1518 = vpack.c.b16 %v1494, %v1492
    %v1519 = vpack.c.b16 %v1495, %v1493
    %v1520 = vpack.c.b16 %v1498, %v1496
    %v1521 = vpack.c.b16 %v1499, %v1497
    %v1522 = vpack.c.b16 %v1502, %v1500
    %v1523 = vpack.c.b16 %v1503, %v1501
    %v1524 = vpack.c.b16 %v1506, %v1504
    %v1525 = vpack.c.b16 %v1507, %v1505
    %v1526 = vpack.c.b16 %v1510, %v1508
    %v1527 = vpack.c.b16 %v1511, %v1509
    %1544 = vmatprep.subr.bf16.mxu0 %v1527
    %1545 = vmatpush1.bf16.msra.mxu0 %v1526
    %1546 = vmatprep.subr.bf16.mxu0 %v1525
    %1547 = vmatpush1.bf16.msra.mxu0 %v1524
    %1548 = vmatprep.subr.bf16.mxu0 %v1523
    %1549 = vmatpush1.bf16.msra.mxu0 %v1522
    %1550 = vmatprep.subr.bf16.mxu0 %v1521
    %1551 = vmatpush1.bf16.msra.mxu0 %v1520
    %1552 = vmatprep.subr.bf16.mxu0 %v1519
    %1553 = vmatpush1.bf16.msra.mxu0 %v1518
    %1554 = vmatprep.subr.bf16.mxu0 %v1517
    %1555 = vmatpush1.bf16.msra.mxu0 %v1516
    %1556 = vmatprep.subr.bf16.mxu0 %v1515
    %1557 = vmatpush1.bf16.msra.mxu0 %v1514
    %1558 = vmatprep.subr.bf16.mxu0 %v1513
    %1559 = vmatpush1.bf16.msra.mxu0 %v1512
    %1560 = vmatprep.subr.bf16.mxu0 0
    %1561 = vmatpush2.bf16.msra.mxu0 0
    %1562 = vmatprep.subr.bf16.mxu0 0
    %1563 = vmatpush2.bf16.msra.mxu0 0
    %1564 = vmatprep.subr.bf16.mxu0 0
    %1565 = vmatpush2.bf16.msra.mxu0 0
    %1566 = vmatprep.subr.bf16.mxu0 0
    %1567 = vmatpush2.bf16.msra.mxu0 0
    %1568 = vmatprep.subr.bf16.mxu0 0
    %1569 = vmatpush2.bf16.msra.mxu0 0
    %1570 = vmatprep.subr.bf16.mxu0 0
    %1571 = vmatpush2.bf16.msra.mxu0 0
    %1572 = vmatprep.subr.bf16.mxu0 0
    %1573 = vmatpush2.bf16.msra.mxu0 0
    %1574 = vmatprep.subr.bf16.mxu0 0
    %1575 = vmatpush2.bf16.msra.mxu0 0
    %1576 = vmatprep.mubr.bf16.mxu0 0
    %1577 = vmatmul.mubr.bf16.gmra.mxu0 %v1274
    %v1578 = vpop.f32.mrf.mxu0
    %v1579 = vadd.f32 %v1446, %v1578
    %v1580 = vpop.f32.mrf.mxu0
    %v1581 = vadd.f32 %v1448, %v1580
    %v1582 = vpop.f32.mrf.mxu0
    %v1583 = vadd.f32 %v1450, %v1582
    %v1584 = vpop.f32.mrf.mxu0
    %v1585 = vadd.f32 %v1452, %v1584
    %1586 = vmatprep.mubr.bf16.mxu0 0
    %1587 = vmatmul.mubr.bf16.gmra.mxu0 %v1275
    %v1588 = vpop.f32.mrf.mxu0
    %v1589 = vadd.f32 %v1456, %v1588
    %v1590 = vpop.f32.mrf.mxu0
    %v1591 = vadd.f32 %v1458, %v1590
    %v1592 = vpop.f32.mrf.mxu0
    %v1593 = vadd.f32 %v1460, %v1592
    %v1594 = vpop.f32.mrf.mxu0
    %v1595 = vadd.f32 %v1462, %v1594
    %1596 = vdwg.mxu0
    %v1597 = vld [vmem:[#allocation2 + $0x1a8] sm:$0xff]
    %v1598 = vld [vmem:[#allocation2 + $0x1b0] sm:$0xff]
    %v1599 = vld [vmem:[#allocation2 + $0x1b8] sm:$0xff]
    %v1600 = vld [vmem:[#allocation2 + $0x1c0] sm:$0xff]
    %v1601 = vld [vmem:[#allocation2 + $0x1c8] sm:$0xff]
    %v1602 = vld [vmem:[#allocation2 + $0x1d0] sm:$0xff]
    %v1603 = vld [vmem:[#allocation2 + $0x1d8] sm:$0xff]
    %v1604 = vld [vmem:[#allocation2 + $0x1e0] sm:$0xff]
    %v1605 = vld [vmem:[#allocation2 + $0x1e8] sm:$0xff]
    %v1606 = vld [vmem:[#allocation2 + $0x1f0] sm:$0xff]
    %v1607 = vld [vmem:[#allocation2 + $0x1f8] sm:$0xff]
    %v1608 = vld [vmem:[#allocation2 + $0x200] sm:$0xff]
    %v1609 = vld [vmem:[#allocation2 + $0x208] sm:$0xff]
    %v1610 = vld [vmem:[#allocation2 + $0x210] sm:$0xff]
    %v1611 = vld [vmem:[#allocation2 + $0x218] sm:$0xff]
    %v1612 = vld [vmem:[#allocation2 + $0x220] sm:$0xff]
    %v1616 = vrot.slane %v1274, 1
    %v1617 = vrot.slane %v1275, 1
    %v1618 = vsel %vm326, %v1616, %v1617
    %v1619 = vrot.slane %v1276, 1
    %v1620 = vsel %vm326, %v1617, %v1619
    %v1639 = vunpack.c.l.b16 %v1597
    %v1640 = vunpack.c.h.b16 %v1597
    %v1641 = vunpack.c.l.b16 %v1598
    %v1642 = vunpack.c.h.b16 %v1598
    %v1643 = vunpack.c.l.b16 %v1599
    %v1644 = vunpack.c.h.b16 %v1599
    %v1645 = vunpack.c.l.b16 %v1600
    %v1646 = vunpack.c.h.b16 %v1600
    %v1647 = vunpack.c.l.b16 %v1601
    %v1648 = vunpack.c.h.b16 %v1601
    %v1649 = vunpack.c.l.b16 %v1602
    %v1650 = vunpack.c.h.b16 %v1602
    %v1651 = vunpack.c.l.b16 %v1603
    %v1652 = vunpack.c.h.b16 %v1603
    %v1653 = vunpack.c.l.b16 %v1604
    %v1654 = vunpack.c.h.b16 %v1604
    %v1655 = vunpack.c.l.b16 %v1605
    %v1656 = vunpack.c.h.b16 %v1605
    %v1657 = vunpack.c.l.b16 %v1606
    %v1658 = vunpack.c.h.b16 %v1606
    %v1659 = vunpack.c.l.b16 %v1607
    %v1660 = vunpack.c.h.b16 %v1607
    %v1661 = vunpack.c.l.b16 %v1608
    %v1662 = vunpack.c.h.b16 %v1608
    %v1663 = vunpack.c.l.b16 %v1609
    %v1664 = vunpack.c.h.b16 %v1609
    %v1665 = vunpack.c.l.b16 %v1610
    %v1666 = vunpack.c.h.b16 %v1610
    %v1667 = vunpack.c.l.b16 %v1611
    %v1668 = vunpack.c.h.b16 %v1611
    %v1669 = vunpack.c.l.b16 %v1612
    %v1670 = vunpack.c.h.b16 %v1612
    %v1671 = vpack.c.b16 %v1641, %v1639
    %v1672 = vpack.c.b16 %v1642, %v1640
    %v1673 = vpack.c.b16 %v1645, %v1643
    %v1674 = vpack.c.b16 %v1646, %v1644
    %v1675 = vpack.c.b16 %v1649, %v1647
    %v1676 = vpack.c.b16 %v1650, %v1648
    %v1677 = vpack.c.b16 %v1653, %v1651
    %v1678 = vpack.c.b16 %v1654, %v1652
    %v1679 = vpack.c.b16 %v1657, %v1655
    %v1680 = vpack.c.b16 %v1658, %v1656
    %v1681 = vpack.c.b16 %v1661, %v1659
    %v1682 = vpack.c.b16 %v1662, %v1660
    %v1683 = vpack.c.b16 %v1665, %v1663
    %v1684 = vpack.c.b16 %v1666, %v1664
    %v1685 = vpack.c.b16 %v1669, %v1667
    %v1686 = vpack.c.b16 %v1670, %v1668
    %1703 = vmatprep.subr.bf16.mxu0 %v1686
    %1704 = vmatpush1.bf16.msra.mxu0 %v1685
    %1705 = vmatprep.subr.bf16.mxu0 %v1684
    %1706 = vmatpush1.bf16.msra.mxu0 %v1683
    %1707 = vmatprep.subr.bf16.mxu0 %v1682
    %1708 = vmatpush1.bf16.msra.mxu0 %v1681
    %1709 = vmatprep.subr.bf16.mxu0 %v1680
    %1710 = vmatpush1.bf16.msra.mxu0 %v1679
    %1711 = vmatprep.subr.bf16.mxu0 %v1678
    %1712 = vmatpush1.bf16.msra.mxu0 %v1677
    %1713 = vmatprep.subr.bf16.mxu0 %v1676
    %1714 = vmatpush1.bf16.msra.mxu0 %v1675
    %1715 = vmatprep.subr.bf16.mxu0 %v1674
    %1716 = vmatpush1.bf16.msra.mxu0 %v1673
    %1717 = vmatprep.subr.bf16.mxu0 %v1672
    %1718 = vmatpush1.bf16.msra.mxu0 %v1671
    %1719 = vmatprep.subr.bf16.mxu0 0
    %1720 = vmatpush2.bf16.msra.mxu0 0
    %1721 = vmatprep.subr.bf16.mxu0 0
    %1722 = vmatpush2.bf16.msra.mxu0 0
    %1723 = vmatprep.subr.bf16.mxu0 0
    %1724 = vmatpush2.bf16.msra.mxu0 0
    %1725 = vmatprep.subr.bf16.mxu0 0
    %1726 = vmatpush2.bf16.msra.mxu0 0
    %1727 = vmatprep.subr.bf16.mxu0 0
    %1728 = vmatpush2.bf16.msra.mxu0 0
    %1729 = vmatprep.subr.bf16.mxu0 0
    %1730 = vmatpush2.bf16.msra.mxu0 0
    %1731 = vmatprep.subr.bf16.mxu0 0
    %1732 = vmatpush2.bf16.msra.mxu0 0
    %1733 = vmatprep.subr.bf16.mxu0 0
    %1734 = vmatpush2.bf16.msra.mxu0 0
    %1735 = vmatprep.mubr.bf16.mxu0 0
    %1736 = vmatmul.mubr.bf16.gmra.mxu0 %v1618
    %v1737 = vpop.f32.mrf.mxu0
    %v1738 = vadd.f32 0.0, %v1737
    %v1739 = vpop.f32.mrf.mxu0
    %v1740 = vadd.f32 0.0, %v1739
    %v1741 = vpop.f32.mrf.mxu0
    %v1742 = vadd.f32 0.0, %v1741
    %v1743 = vpop.f32.mrf.mxu0
    %v1744 = vadd.f32 0.0, %v1743
    %1745 = vmatprep.mubr.bf16.mxu0 0
    %1746 = vmatmul.mubr.bf16.gmra.mxu0 %v1620
    %v1747 = vpop.f32.mrf.mxu0
    %v1748 = vadd.f32 0.0, %v1747
    %v1749 = vpop.f32.mrf.mxu0
    %v1750 = vadd.f32 0.0, %v1749
    %v1751 = vpop.f32.mrf.mxu0
    %v1752 = vadd.f32 0.0, %v1751
    %v1753 = vpop.f32.mrf.mxu0
    %v1754 = vadd.f32 0.0, %v1753
    %1755 = vdwg.mxu0
    %v1756 = vadd.f32 %v1579, %v1738
    %v1757 = vadd.f32 %v1581, %v1740
    %v1758 = vadd.f32 %v1583, %v1742
    %v1759 = vadd.f32 %v1585, %v1744
    %v1760 = vadd.f32 %v1589, %v1748
    %v1761 = vadd.f32 %v1591, %v1750
    %v1762 = vadd.f32 %v1593, %v1752
    %v1763 = vadd.f32 %v1595, %v1754
    %v1764 = vld [vmem:[#allocation2 + $0x228] sm:$0xff]
    %v1765 = vld [vmem:[#allocation2 + $0x230] sm:$0xff]
    %v1766 = vld [vmem:[#allocation2 + $0x238] sm:$0xff]
    %v1767 = vld [vmem:[#allocation2 + $0x240] sm:$0xff]
    %v1768 = vld [vmem:[#allocation2 + $0x248] sm:$0xff]
    %v1769 = vld [vmem:[#allocation2 + $0x250] sm:$0xff]
    %v1770 = vld [vmem:[#allocation2 + $0x258] sm:$0xff]
    %v1771 = vld [vmem:[#allocation2 + $0x260] sm:$0xff]
    %v1772 = vld [vmem:[#allocation2 + $0x268] sm:$0xff]
    %v1773 = vld [vmem:[#allocation2 + $0x270] sm:$0xff]
    %v1774 = vld [vmem:[#allocation2 + $0x278] sm:$0xff]
    %v1775 = vld [vmem:[#allocation2 + $0x280] sm:$0xff]
    %v1776 = vld [vmem:[#allocation2 + $0x288] sm:$0xff]
    %v1777 = vld [vmem:[#allocation2 + $0x290] sm:$0xff]
    %v1778 = vld [vmem:[#allocation2 + $0x298] sm:$0xff]
    %v1779 = vld [vmem:[#allocation2 + $0x2a0] sm:$0xff]
    %v1780 = vrot.slane %v1310, 1
    %v1781 = vrot.slane %v1312, 2
    %v1782 = vor.u32 %v1780, %v1781
    %v1783 = vrot.slane %v1321, 1
    %v1784 = vrot.slane %v1317, 2
    %v1785 = vor.u32 %v1783, %v1784
    %v1786 = vsel %vm465, %v1782, %v1785
    %v1787 = vshrl.u32 %v1276, 16
    %v1789 = vrot.slane %v1787, 1
    %v1790 = vrot.slane %v1325, 2
    %v1791 = vor.u32 %v1789, %v1790
    %v1792 = vsel %vm465, %v1785, %v1791
    %v1811 = vunpack.c.l.b16 %v1764
    %v1812 = vunpack.c.h.b16 %v1764
    %v1813 = vunpack.c.l.b16 %v1765
    %v1814 = vunpack.c.h.b16 %v1765
    %v1815 = vunpack.c.l.b16 %v1766
    %v1816 = vunpack.c.h.b16 %v1766
    %v1817 = vunpack.c.l.b16 %v1767
    %v1818 = vunpack.c.h.b16 %v1767
    %v1819 = vunpack.c.l.b16 %v1768
    %v1820 = vunpack.c.h.b16 %v1768
    %v1821 = vunpack.c.l.b16 %v1769
    %v1822 = vunpack.c.h.b16 %v1769
    %v1823 = vunpack.c.l.b16 %v1770
    %v1824 = vunpack.c.h.b16 %v1770
    %v1825 = vunpack.c.l.b16 %v1771
    %v1826 = vunpack.c.h.b16 %v1771
    %v1827 = vunpack.c.l.b16 %v1772
    %v1828 = vunpack.c.h.b16 %v1772
    %v1829 = vunpack.c.l.b16 %v1773
    %v1830 = vunpack.c.h.b16 %v1773
    %v1831 = vunpack.c.l.b16 %v1774
    %v1832 = vunpack.c.h.b16 %v1774
    %v1833 = vunpack.c.l.b16 %v1775
    %v1834 = vunpack.c.h.b16 %v1775
    %v1835 = vunpack.c.l.b16 %v1776
    %v1836 = vunpack.c.h.b16 %v1776
    %v1837 = vunpack.c.l.b16 %v1777
    %v1838 = vunpack.c.h.b16 %v1777
    %v1839 = vunpack.c.l.b16 %v1778
    %v1840 = vunpack.c.h.b16 %v1778
    %v1841 = vunpack.c.l.b16 %v1779
    %v1842 = vunpack.c.h.b16 %v1779
    %v1843 = vpack.c.b16 %v1813, %v1811
    %v1844 = vpack.c.b16 %v1814, %v1812
    %v1845 = vpack.c.b16 %v1817, %v1815
    %v1846 = vpack.c.b16 %v1818, %v1816
    %v1847 = vpack.c.b16 %v1821, %v1819
    %v1848 = vpack.c.b16 %v1822, %v1820
    %v1849 = vpack.c.b16 %v1825, %v1823
    %v1850 = vpack.c.b16 %v1826, %v1824
    %v1851 = vpack.c.b16 %v1829, %v1827
    %v1852 = vpack.c.b16 %v1830, %v1828
    %v1853 = vpack.c.b16 %v1833, %v1831
    %v1854 = vpack.c.b16 %v1834, %v1832
    %v1855 = vpack.c.b16 %v1837, %v1835
    %v1856 = vpack.c.b16 %v1838, %v1836
    %v1857 = vpack.c.b16 %v1841, %v1839
    %v1858 = vpack.c.b16 %v1842, %v1840
    %1875 = vmatprep.subr.bf16.mxu0 %v1858
    %1876 = vmatpush1.bf16.msra.mxu0 %v1857
    %1877 = vmatprep.subr.bf16.mxu0 %v1856
    %1878 = vmatpush1.bf16.msra.mxu0 %v1855
    %1879 = vmatprep.subr.bf16.mxu0 %v1854
    %1880 = vmatpush1.bf16.msra.mxu0 %v1853
    %1881 = vmatprep.subr.bf16.mxu0 %v1852
    %1882 = vmatpush1.bf16.msra.mxu0 %v1851
    %1883 = vmatprep.subr.bf16.mxu0 %v1850
    %1884 = vmatpush1.bf16.msra.mxu0 %v1849
    %1885 = vmatprep.subr.bf16.mxu0 %v1848
    %1886 = vmatpush1.bf16.msra.mxu0 %v1847
    %1887 = vmatprep.subr.bf16.mxu0 %v1846
    %1888 = vmatpush1.bf16.msra.mxu0 %v1845
    %1889 = vmatprep.subr.bf16.mxu0 %v1844
    %1890 = vmatpush1.bf16.msra.mxu0 %v1843
    %1891 = vmatprep.subr.bf16.mxu0 0
    %1892 = vmatpush2.bf16.msra.mxu0 0
    %1893 = vmatprep.subr.bf16.mxu0 0
    %1894 = vmatpush2.bf16.msra.mxu0 0
    %1895 = vmatprep.subr.bf16.mxu0 0
    %1896 = vmatpush2.bf16.msra.mxu0 0
    %1897 = vmatprep.subr.bf16.mxu0 0
    %1898 = vmatpush2.bf16.msra.mxu0 0
    %1899 = vmatprep.subr.bf16.mxu0 0
    %1900 = vmatpush2.bf16.msra.mxu0 0
    %1901 = vmatprep.subr.bf16.mxu0 0
    %1902 = vmatpush2.bf16.msra.mxu0 0
    %1903 = vmatprep.subr.bf16.mxu0 0
    %1904 = vmatpush2.bf16.msra.mxu0 0
    %1905 = vmatprep.subr.bf16.mxu0 0
    %1906 = vmatpush2.bf16.msra.mxu0 0
    %1907 = vmatprep.mubr.bf16.mxu0 0
    %1908 = vmatmul.mubr.bf16.gmra.mxu0 %v1786
    %v1909 = vpop.f32.mrf.mxu0
    %v1910 = vadd.f32 0.0, %v1909
    %v1911 = vpop.f32.mrf.mxu0
    %v1912 = vadd.f32 0.0, %v1911
    %v1913 = vpop.f32.mrf.mxu0
    %v1914 = vadd.f32 0.0, %v1913
    %v1915 = vpop.f32.mrf.mxu0
    %v1916 = vadd.f32 0.0, %v1915
    %1917 = vmatprep.mubr.bf16.mxu0 0
    %1918 = vmatmul.mubr.bf16.gmra.mxu0 %v1792
    %v1919 = vpop.f32.mrf.mxu0
    %v1920 = vadd.f32 0.0, %v1919
    %v1921 = vpop.f32.mrf.mxu0
    %v1922 = vadd.f32 0.0, %v1921
    %v1923 = vpop.f32.mrf.mxu0
    %v1924 = vadd.f32 0.0, %v1923
    %v1925 = vpop.f32.mrf.mxu0
    %v1926 = vadd.f32 0.0, %v1925
    %1927 = vdwg.mxu0
    %v1928 = vadd.f32 %v1756, %v1910
    %v1929 = vadd.f32 %v1757, %v1912
    %v1930 = vadd.f32 %v1758, %v1914
    %v1931 = vadd.f32 %v1759, %v1916
    %v1932 = vadd.f32 %v1760, %v1920
    %v1933 = vadd.f32 %v1761, %v1922
    %v1934 = vadd.f32 %v1762, %v1924
    %v1935 = vadd.f32 %v1763, %v1926
    %v1936 = vld [vmem:[#allocation2 + $0x2a8] sm:$0xff]
    %v1937 = vld [vmem:[#allocation2 + $0x2b0] sm:$0xff]
    %v1938 = vld [vmem:[#allocation2 + $0x2b8] sm:$0xff]
    %v1939 = vld [vmem:[#allocation2 + $0x2c0] sm:$0xff]
    %v1940 = vld [vmem:[#allocation2 + $0x2c8] sm:$0xff]
    %v1941 = vld [vmem:[#allocation2 + $0x2d0] sm:$0xff]
    %v1942 = vld [vmem:[#allocation2 + $0x2d8] sm:$0xff]
    %v1943 = vld [vmem:[#allocation2 + $0x2e0] sm:$0xff]
    %v1944 = vld [vmem:[#allocation2 + $0x2e8] sm:$0xff]
    %v1945 = vld [vmem:[#allocation2 + $0x2f0] sm:$0xff]
    %v1946 = vld [vmem:[#allocation2 + $0x2f8] sm:$0xff]
    %v1947 = vld [vmem:[#allocation2 + $0x300] sm:$0xff]
    %v1948 = vld [vmem:[#allocation2 + $0x308] sm:$0xff]
    %v1949 = vld [vmem:[#allocation2 + $0x310] sm:$0xff]
    %v1950 = vld [vmem:[#allocation2 + $0x318] sm:$0xff]
    %v1951 = vld [vmem:[#allocation2 + $0x320] sm:$0xff]
    %v1952 = vrot.slane %v1274, 2
    %v1953 = vrot.slane %v1275, 2
    %v1954 = vsel %vm616, %v1952, %v1953
    %v1955 = vrot.slane %v1276, 2
    %v1956 = vsel %vm616, %v1953, %v1955
    %v1975 = vunpack.c.l.b16 %v1936
    %v1976 = vunpack.c.h.b16 %v1936
    %v1977 = vunpack.c.l.b16 %v1937
    %v1978 = vunpack.c.h.b16 %v1937
    %v1979 = vunpack.c.l.b16 %v1938
    %v1980 = vunpack.c.h.b16 %v1938
    %v1981 = vunpack.c.l.b16 %v1939
    %v1982 = vunpack.c.h.b16 %v1939
    %v1983 = vunpack.c.l.b16 %v1940
    %v1984 = vunpack.c.h.b16 %v1940
    %v1985 = vunpack.c.l.b16 %v1941
    %v1986 = vunpack.c.h.b16 %v1941
    %v1987 = vunpack.c.l.b16 %v1942
    %v1988 = vunpack.c.h.b16 %v1942
    %v1989 = vunpack.c.l.b16 %v1943
    %v1990 = vunpack.c.h.b16 %v1943
    %v1991 = vunpack.c.l.b16 %v1944
    %v1992 = vunpack.c.h.b16 %v1944
    %v1993 = vunpack.c.l.b16 %v1945
    %v1994 = vunpack.c.h.b16 %v1945
    %v1995 = vunpack.c.l.b16 %v1946
    %v1996 = vunpack.c.h.b16 %v1946
    %v1997 = vunpack.c.l.b16 %v1947
    %v1998 = vunpack.c.h.b16 %v1947
    %v1999 = vunpack.c.l.b16 %v1948
    %v2000 = vunpack.c.h.b16 %v1948
    %v2001 = vunpack.c.l.b16 %v1949
    %v2002 = vunpack.c.h.b16 %v1949
    %v2003 = vunpack.c.l.b16 %v1950
    %v2004 = vunpack.c.h.b16 %v1950
    %v2005 = vunpack.c.l.b16 %v1951
    %v2006 = vunpack.c.h.b16 %v1951
    %v2007 = vpack.c.b16 %v1977, %v1975
    %v2008 = vpack.c.b16 %v1978, %v1976
    %v2009 = vpack.c.b16 %v1981, %v1979
    %v2010 = vpack.c.b16 %v1982, %v1980
    %v2011 = vpack.c.b16 %v1985, %v1983
    %v2012 = vpack.c.b16 %v1986, %v1984
    %v2013 = vpack.c.b16 %v1989, %v1987
    %v2014 = vpack.c.b16 %v1990, %v1988
    %v2015 = vpack.c.b16 %v1993, %v1991
    %v2016 = vpack.c.b16 %v1994, %v1992
    %v2017 = vpack.c.b16 %v1997, %v1995
    %v2018 = vpack.c.b16 %v1998, %v1996
    %v2019 = vpack.c.b16 %v2001, %v1999
    %v2020 = vpack.c.b16 %v2002, %v2000
    %v2021 = vpack.c.b16 %v2005, %v2003
    %v2022 = vpack.c.b16 %v2006, %v2004
    %2039 = vmatprep.subr.bf16.mxu0 %v2022
    %2040 = vmatpush1.bf16.msra.mxu0 %v2021
    %2041 = vmatprep.subr.bf16.mxu0 %v2020
    %2042 = vmatpush1.bf16.msra.mxu0 %v2019
    %2043 = vmatprep.subr.bf16.mxu0 %v2018
    %2044 = vmatpush1.bf16.msra.mxu0 %v2017
    %2045 = vmatprep.subr.bf16.mxu0 %v2016
    %2046 = vmatpush1.bf16.msra.mxu0 %v2015
    %2047 = vmatprep.subr.bf16.mxu0 %v2014
    %2048 = vmatpush1.bf16.msra.mxu0 %v2013
    %2049 = vmatprep.subr.bf16.mxu0 %v2012
    %2050 = vmatpush1.bf16.msra.mxu0 %v2011
    %2051 = vmatprep.subr.bf16.mxu0 %v2010
    %2052 = vmatpush1.bf16.msra.mxu0 %v2009
    %2053 = vmatprep.subr.bf16.mxu0 %v2008
    %2054 = vmatpush1.bf16.msra.mxu0 %v2007
    %2055 = vmatprep.subr.bf16.mxu0 0
    %2056 = vmatpush2.bf16.msra.mxu0 0
    %2057 = vmatprep.subr.bf16.mxu0 0
    %2058 = vmatpush2.bf16.msra.mxu0 0
    %2059 = vmatprep.subr.bf16.mxu0 0
    %2060 = vmatpush2.bf16.msra.mxu0 0
    %2061 = vmatprep.subr.bf16.mxu0 0
    %2062 = vmatpush2.bf16.msra.mxu0 0
    %2063 = vmatprep.subr.bf16.mxu0 0
    %2064 = vmatpush2.bf16.msra.mxu0 0
    %2065 = vmatprep.subr.bf16.mxu0 0
    %2066 = vmatpush2.bf16.msra.mxu0 0
    %2067 = vmatprep.subr.bf16.mxu0 0
    %2068 = vmatpush2.bf16.msra.mxu0 0
    %2069 = vmatprep.subr.bf16.mxu0 0
    %2070 = vmatpush2.bf16.msra.mxu0 0
    %2071 = vmatprep.mubr.bf16.mxu0 0
    %2072 = vmatmul.mubr.bf16.gmra.mxu0 %v1954
    %v2073 = vpop.f32.mrf.mxu0
    %v2074 = vadd.f32 0.0, %v2073
    %v2075 = vpop.f32.mrf.mxu0
    %v2076 = vadd.f32 0.0, %v2075
    %v2077 = vpop.f32.mrf.mxu0
    %v2078 = vadd.f32 0.0, %v2077
    %v2079 = vpop.f32.mrf.mxu0
    %v2080 = vadd.f32 0.0, %v2079
    %2081 = vmatprep.mubr.bf16.mxu0 0
    %2082 = vmatmul.mubr.bf16.gmra.mxu0 %v1956
    %v2083 = vpop.f32.mrf.mxu0
    %v2084 = vadd.f32 0.0, %v2083
    %v2085 = vpop.f32.mrf.mxu0
    %v2086 = vadd.f32 0.0, %v2085
    %v2087 = vpop.f32.mrf.mxu0
    %v2088 = vadd.f32 0.0, %v2087
    %v2089 = vpop.f32.mrf.mxu0
    %v2090 = vadd.f32 0.0, %v2089
    %2091 = vdwg.mxu0
    %v2092 = vadd.f32 %v1928, %v2074
    %v2093 = vadd.f32 %v1929, %v2076
    %v2094 = vadd.f32 %v1930, %v2078
    %v2095 = vadd.f32 %v1931, %v2080
    %v2096 = vadd.f32 %v1932, %v2084
    %v2097 = vadd.f32 %v1933, %v2086
    %v2098 = vadd.f32 %v1934, %v2088
    %v2099 = vadd.f32 %v1935, %v2090
    %v2100 = vld [vmem:[#allocation2 + $0x328] sm:$0x11]
    %v2101 = vunpack.c.l.bf16 %v2100
    %v2102 = vunpack.c.h.bf16 %v2100
    %v2103 = vlaneseq
    %v2104 = vshrl.u32 %v2103, 7
    %v2105 = vsub.s32 0, %v2104
    %v2106 = vrot.slane %v2101, %v2105
    %v2107 = vlaneseq
    %v2108 = vshrl.u32 %v2107, 7
    %v2109 = vsub.s32 0, %v2108
    %v2110 = vrot.slane %v2102, %v2109
    %v2111 = vadd.f32 %v2092, %v2106
    %v2112 = vadd.f32 %v2093, %v2110
    %v2113 = vadd.f32 %v2094, %v2106
    %v2114 = vadd.f32 %v2095, %v2110
    %v2115 = vadd.f32 %v2096, %v2106
    %v2116 = vadd.f32 %v2097, %v2110
    %v2117 = vadd.f32 %v2098, %v2106
    %v2118 = vadd.f32 %v2099, %v2110
    %v2119 = vmax.f32 %v2111, 0.0
    %v2120 = vmax.f32 %v2112, 0.0
    %v2121 = vmax.f32 %v2113, 0.0
    %v2122 = vmax.f32 %v2114, 0.0
    %v2123 = vmax.f32 %v2115, 0.0
    %v2124 = vmax.f32 %v2116, 0.0
    %v2125 = vmax.f32 %v2117, 0.0
    %v2126 = vmax.f32 %v2118, 0.0
    %v2127 = vmax.f32 %v2119, %v2120
    %v2128 = vmax.f32 %v2121, %v2122
    %v2129 = vmax.f32 %v2123, %v2124
    %v2130 = vmax.f32 %v2125, %v2126
    %v2135 = vcombine.high %v2127, %v2127
    %v2137 = vunpack.c.l.s4 1983009808
    %v2138 = vunpack.c.0.s8 %v2137
    %v2139 = vlaneseq
    %v2140 = vshrl.u32 %v2139, 7
    %v2141 = vsub.s32 %v2138, %v2140
    %v2142 = vrot.slane %v2127, %v2141
    %v2144 = vunpack.c.l.s4 1983009808
    %v2145 = vunpack.c.0.s8 %v2144
    %v2146 = vlaneseq
    %v2147 = vshrl.u32 %v2146, 7
    %v2148 = vsub.s32 %v2145, %v2147
    %v2149 = vrot.slane %v2135, %v2148
    %v2150 = vcombine.high %v2142, %v2142
    %v2151 = vcombine.high %v2149, %v2149
    %v2152 = vcombine.high %v2128, %v2128
    %v2154 = vunpack.c.l.s4 1983009808
    %v2155 = vunpack.c.0.s8 %v2154
    %v2156 = vlaneseq
    %v2157 = vshrl.u32 %v2156, 7
    %v2158 = vsub.s32 %v2155, %v2157
    %v2159 = vrot.slane %v2128, %v2158
    %v2161 = vunpack.c.l.s4 1983009808
    %v2162 = vunpack.c.0.s8 %v2161
    %v2163 = vlaneseq
    %v2164 = vshrl.u32 %v2163, 7
    %v2165 = vsub.s32 %v2162, %v2164
    %v2166 = vrot.slane %v2152, %v2165
    %v2167 = vcombine.high %v2159, %v2159
    %v2168 = vcombine.high %v2166, %v2166
    %v2169 = vcombine.high %v2129, %v2129
    %v2171 = vunpack.c.l.s4 1983009808
    %v2172 = vunpack.c.0.s8 %v2171
    %v2173 = vlaneseq
    %v2174 = vshrl.u32 %v2173, 7
    %v2175 = vsub.s32 %v2172, %v2174
    %v2176 = vrot.slane %v2129, %v2175
    %v2178 = vunpack.c.l.s4 1983009808
    %v2179 = vunpack.c.0.s8 %v2178
    %v2180 = vlaneseq
    %v2181 = vshrl.u32 %v2180, 7
    %v2182 = vsub.s32 %v2179, %v2181
    %v2183 = vrot.slane %v2169, %v2182
    %v2184 = vcombine.high %v2176, %v2176
    %v2185 = vcombine.high %v2183, %v2183
    %v2186 = vcombine.high %v2130, %v2130
    %v2188 = vunpack.c.l.s4 1983009808
    %v2189 = vunpack.c.0.s8 %v2188
    %v2190 = vlaneseq
    %v2191 = vshrl.u32 %v2190, 7
    %v2192 = vsub.s32 %v2189, %v2191
    %v2193 = vrot.slane %v2130, %v2192
    %v2195 = vunpack.c.l.s4 1983009808
    %v2196 = vunpack.c.0.s8 %v2195
    %v2197 = vlaneseq
    %v2198 = vshrl.u32 %v2197, 7
    %v2199 = vsub.s32 %v2196, %v2198
    %v2200 = vrot.slane %v2186, %v2199
    %v2201 = vcombine.high %v2193, %v2193
    %v2202 = vcombine.high %v2200, %v2200
    %v2219 = vsel %vm978, %v2142, -inf
    %v2220 = vrot.slane %v2219, 4
    %v2221 = vmax.f32 %v2219, %v2220
    %v2222 = vrot.slane %v2221, 2
    %v2223 = vmax.f32 %v2221, %v2222
    %v2224 = vrot.slane %v2223, 1
    %v2225 = vmax.f32 %v2223, %v2224
    %v2226 = vsel %vm978, %v2150, -inf
    %v2227 = vrot.slane %v2226, 4
    %v2228 = vmax.f32 %v2226, %v2227
    %v2229 = vrot.slane %v2228, 2
    %v2230 = vmax.f32 %v2228, %v2229
    %v2231 = vrot.slane %v2230, 1
    %v2232 = vmax.f32 %v2230, %v2231
    %v2233 = vsel %vm978, %v2149, -inf
    %v2234 = vrot.slane %v2233, 4
    %v2235 = vmax.f32 %v2233, %v2234
    %v2236 = vrot.slane %v2235, 2
    %v2237 = vmax.f32 %v2235, %v2236
    %v2238 = vrot.slane %v2237, 1
    %v2239 = vmax.f32 %v2237, %v2238
    %v2240 = vsel %vm978, %v2151, -inf
    %v2241 = vrot.slane %v2240, 4
    %v2242 = vmax.f32 %v2240, %v2241
    %v2243 = vrot.slane %v2242, 2
    %v2244 = vmax.f32 %v2242, %v2243
    %v2245 = vrot.slane %v2244, 1
    %v2246 = vmax.f32 %v2244, %v2245
    %v2247 = vsel %vm978, %v2159, -inf
    %v2248 = vrot.slane %v2247, 4
    %v2249 = vmax.f32 %v2247, %v2248
    %v2250 = vrot.slane %v2249, 2
    %v2251 = vmax.f32 %v2249, %v2250
    %v2252 = vrot.slane %v2251, 1
    %v2253 = vmax.f32 %v2251, %v2252
    %v2254 = vsel %vm978, %v2167, -inf
    %v2255 = vrot.slane %v2254, 4
    %v2256 = vmax.f32 %v2254, %v2255
    %v2257 = vrot.slane %v2256, 2
    %v2258 = vmax.f32 %v2256, %v2257
    %v2259 = vrot.slane %v2258, 1
    %v2260 = vmax.f32 %v2258, %v2259
    %v2261 = vsel %vm978, %v2166, -inf
    %v2262 = vrot.slane %v2261, 4
    %v2263 = vmax.f32 %v2261, %v2262
    %v2264 = vrot.slane %v2263, 2
    %v2265 = vmax.f32 %v2263, %v2264
    %v2266 = vrot.slane %v2265, 1
    %v2267 = vmax.f32 %v2265, %v2266
    %v2268 = vsel %vm978, %v2168, -inf
    %v2269 = vrot.slane %v2268, 4
    %v2270 = vmax.f32 %v2268, %v2269
    %v2271 = vrot.slane %v2270, 2
    %v2272 = vmax.f32 %v2270, %v2271
    %v2273 = vrot.slane %v2272, 1
    %v2274 = vmax.f32 %v2272, %v2273
    %v2275 = vsel %vm978, %v2176, -inf
    %v2276 = vrot.slane %v2275, 4
    %v2277 = vmax.f32 %v2275, %v2276
    %v2278 = vrot.slane %v2277, 2
    %v2279 = vmax.f32 %v2277, %v2278
    %v2280 = vrot.slane %v2279, 1
    %v2281 = vmax.f32 %v2279, %v2280
    %v2282 = vsel %vm978, %v2184, -inf
    %v2283 = vrot.slane %v2282, 4
    %v2284 = vmax.f32 %v2282, %v2283
    %v2285 = vrot.slane %v2284, 2
    %v2286 = vmax.f32 %v2284, %v2285
    %v2287 = vrot.slane %v2286, 1
    %v2288 = vmax.f32 %v2286, %v2287
    %v2289 = vsel %vm978, %v2183, -inf
    %v2290 = vrot.slane %v2289, 4
    %v2291 = vmax.f32 %v2289, %v2290
    %v2292 = vrot.slane %v2291, 2
    %v2293 = vmax.f32 %v2291, %v2292
    %v2294 = vrot.slane %v2293, 1
    %v2295 = vmax.f32 %v2293, %v2294
    %v2296 = vsel %vm978, %v2185, -inf
    %v2297 = vrot.slane %v2296, 4
    %v2298 = vmax.f32 %v2296, %v2297
    %v2299 = vrot.slane %v2298, 2
    %v2300 = vmax.f32 %v2298, %v2299
    %v2301 = vrot.slane %v2300, 1
    %v2302 = vmax.f32 %v2300, %v2301
    %v2303 = vsel %vm978, %v2193, -inf
    %v2304 = vrot.slane %v2303, 4
    %v2305 = vmax.f32 %v2303, %v2304
    %v2306 = vrot.slane %v2305, 2
    %v2307 = vmax.f32 %v2305, %v2306
    %v2308 = vrot.slane %v2307, 1
    %v2309 = vmax.f32 %v2307, %v2308
    %v2310 = vsel %vm978, %v2201, -inf
    %v2311 = vrot.slane %v2310, 4
    %v2312 = vmax.f32 %v2310, %v2311
    %v2313 = vrot.slane %v2312, 2
    %v2314 = vmax.f32 %v2312, %v2313
    %v2315 = vrot.slane %v2314, 1
    %v2316 = vmax.f32 %v2314, %v2315
    %v2317 = vsel %vm978, %v2200, -inf
    %v2318 = vrot.slane %v2317, 4
    %v2319 = vmax.f32 %v2317, %v2318
    %v2320 = vrot.slane %v2319, 2
    %v2321 = vmax.f32 %v2319, %v2320
    %v2322 = vrot.slane %v2321, 1
    %v2323 = vmax.f32 %v2321, %v2322
    %v2324 = vsel %vm978, %v2202, -inf
    %v2325 = vrot.slane %v2324, 4
    %v2326 = vmax.f32 %v2324, %v2325
    %v2327 = vrot.slane %v2326, 2
    %v2328 = vmax.f32 %v2326, %v2327
    %v2329 = vrot.slane %v2328, 1
    %v2330 = vmax.f32 %v2328, %v2329
    %v2347 = vsel %vm1235, %v2232, %v2225
    %v2348 = vsel %vm1237, %v2239, %v2347
    %v2349 = vsel %vm1239, %v2246, %v2348
    %v2350 = vsel %vm1241, %v2253, %v2349
    %v2351 = vsel %vm1243, %v2260, %v2350
    %v2352 = vsel %vm1245, %v2267, %v2351
    %v2353 = vsel %vm1247, %v2274, %v2352
    %v2354 = vsel %vm1235, %v2288, %v2281
    %v2355 = vsel %vm1237, %v2295, %v2354
    %v2356 = vsel %vm1239, %v2302, %v2355
    %v2357 = vsel %vm1241, %v2309, %v2356
    %v2358 = vsel %vm1243, %v2316, %v2357
    %v2359 = vsel %vm1245, %v2323, %v2358
    %v2360 = vsel %vm1247, %v2330, %v2359
    %v2363 = vpack.c.bf16 %v2360, %v2353
    %v2364 = vld [vmem:[%s2 + $0x180] sm:$0x3]
    %v2365 = vunpack.c.l.bf16 %v2364
    %v2366 = vld [vmem:[%s2] sm:$0xf]
    %v2367 = vld [vmem:[%s2 + $0x4] sm:$0xf]
    %v2368 = vld [vmem:[%s2 + $0x8] sm:$0xf]
    %v2369 = vld [vmem:[%s2 + $0xc] sm:$0xf]
    %v2370 = vld [vmem:[%s2 + $0x10] sm:$0xf]
    %v2371 = vld [vmem:[%s2 + $0x14] sm:$0xf]
    %v2372 = vld [vmem:[%s2 + $0x18] sm:$0xf]
    %v2373 = vld [vmem:[%s2 + $0x1c] sm:$0xf]
    %v2374 = vld [vmem:[%s2 + $0x20] sm:$0xf]
    %v2375 = vld [vmem:[%s2 + $0x24] sm:$0xf]
    %v2376 = vld [vmem:[%s2 + $0x28] sm:$0xf]
    %v2377 = vld [vmem:[%s2 + $0x2c] sm:$0xf]
    %v2378 = vld [vmem:[%s2 + $0x30] sm:$0xf]
    %v2379 = vld [vmem:[%s2 + $0x34] sm:$0xf]
    %v2380 = vld [vmem:[%s2 + $0x38] sm:$0xf]
    %v2381 = vld [vmem:[%s2 + $0x3c] sm:$0xf]
    %v2382 = vld [vmem:[%s2 + $0x40] sm:$0xf]
    %v2383 = vld [vmem:[%s2 + $0x44] sm:$0xf]
    %v2384 = vld [vmem:[%s2 + $0x48] sm:$0xf]
    %v2385 = vld [vmem:[%s2 + $0x4c] sm:$0xf]
    %v2386 = vld [vmem:[%s2 + $0x50] sm:$0xf]
    %v2387 = vld [vmem:[%s2 + $0x54] sm:$0xf]
    %v2388 = vld [vmem:[%s2 + $0x58] sm:$0xf]
    %v2389 = vld [vmem:[%s2 + $0x5c] sm:$0xf]
    %v2390 = vld [vmem:[%s2 + $0x60] sm:$0xf]
    %v2391 = vld [vmem:[%s2 + $0x64] sm:$0xf]
    %v2392 = vld [vmem:[%s2 + $0x68] sm:$0xf]
    %v2393 = vld [vmem:[%s2 + $0x6c] sm:$0xf]
    %v2394 = vld [vmem:[%s2 + $0x70] sm:$0xf]
    %v2395 = vld [vmem:[%s2 + $0x74] sm:$0xf]
    %v2396 = vld [vmem:[%s2 + $0x78] sm:$0xf]
    %v2397 = vld [vmem:[%s2 + $0x7c] sm:$0xf]
    %v2399 = vshrl.u32 %v2363, 16
    %v2401 = vshll.u32 %v2363, 16
    %v2403 = vrot.slane %v2401, 1
    %v2404 = vor.u32 %v2399, %v2403
    %v2405 = vsel %vm69, %v2404, %v1327
    %v2423 = vunpack.c.l.b16 %v2382
    %v2424 = vunpack.c.l.b16 %v2383
    %v2425 = vunpack.c.l.b16 %v2384
    %v2426 = vunpack.c.l.b16 %v2385
    %v2427 = vunpack.c.l.b16 %v2386
    %v2428 = vunpack.c.l.b16 %v2387
    %v2429 = vunpack.c.l.b16 %v2388
    %v2430 = vunpack.c.l.b16 %v2389
    %v2431 = vunpack.c.l.b16 %v2390
    %v2432 = vunpack.c.l.b16 %v2391
    %v2433 = vunpack.c.l.b16 %v2392
    %v2434 = vunpack.c.l.b16 %v2393
    %v2435 = vunpack.c.l.b16 %v2394
    %v2436 = vunpack.c.l.b16 %v2395
    %v2437 = vunpack.c.l.b16 %v2396
    %v2438 = vunpack.c.l.b16 %v2397
    %v2439 = vpack.c.b16 %v2424, %v2423
    %v2440 = vpack.c.b16 %v2426, %v2425
    %v2441 = vpack.c.b16 %v2428, %v2427
    %v2442 = vpack.c.b16 %v2430, %v2429
    %v2443 = vpack.c.b16 %v2432, %v2431
    %v2444 = vpack.c.b16 %v2434, %v2433
    %v2445 = vpack.c.b16 %v2436, %v2435
    %v2446 = vpack.c.b16 %v2438, %v2437
    %2455 = vmatprep.subr.bf16.mxu0 0
    %2456 = vmatpush1.bf16.msra.mxu0 %v2446
    %2457 = vmatprep.subr.bf16.mxu0 0
    %2458 = vmatpush1.bf16.msra.mxu0 %v2445
    %2459 = vmatprep.subr.bf16.mxu0 0
    %2460 = vmatpush1.bf16.msra.mxu0 %v2444
    %2461 = vmatprep.subr.bf16.mxu0 0
    %2462 = vmatpush1.bf16.msra.mxu0 %v2443
    %2463 = vmatprep.subr.bf16.mxu0 0
    %2464 = vmatpush1.bf16.msra.mxu0 %v2442
    %2465 = vmatprep.subr.bf16.mxu0 0
    %2466 = vmatpush1.bf16.msra.mxu0 %v2441
    %2467 = vmatprep.subr.bf16.mxu0 0
    %2468 = vmatpush1.bf16.msra.mxu0 %v2440
    %2469 = vmatprep.subr.bf16.mxu0 0
    %2470 = vmatpush1.bf16.msra.mxu0 %v2439
    %2471 = vmatprep.subr.bf16.mxu0 0
    %2472 = vmatpush2.bf16.msra.mxu0 0
    %2473 = vmatprep.subr.bf16.mxu0 0
    %2474 = vmatpush2.bf16.msra.mxu0 0
    %2475 = vmatprep.subr.bf16.mxu0 0
    %2476 = vmatpush2.bf16.msra.mxu0 0
    %2477 = vmatprep.subr.bf16.mxu0 0
    %2478 = vmatpush2.bf16.msra.mxu0 0
    %2479 = vmatprep.subr.bf16.mxu0 0
    %2480 = vmatpush2.bf16.msra.mxu0 0
    %2481 = vmatprep.subr.bf16.mxu0 0
    %2482 = vmatpush2.bf16.msra.mxu0 0
    %2483 = vmatprep.subr.bf16.mxu0 0
    %2484 = vmatpush2.bf16.msra.mxu0 0
    %2485 = vmatprep.subr.bf16.mxu0 0
    %2486 = vmatpush2.bf16.msra.mxu0 0
    %2487 = vmatprep.mubr.bf16.mxu0 0
    %2488 = vmatmul.mubr.bf16.gmra.mxu0 %v2405
    %v2489 = vpop.f32.mrf.mxu0
    %v2490 = vadd.f32 0.0, %v2489
    %v2491 = vpop.f32.mrf.mxu0
    %v2492 = vpop.f32.mrf.mxu0
    %v2493 = vadd.f32 0.0, %v2492
    %v2494 = vpop.f32.mrf.mxu0
    %2495 = vdwg.mxu0
    %v2512 = vunpack.c.l.b16 %v2366
    %v2513 = vunpack.c.l.b16 %v2367
    %v2514 = vunpack.c.l.b16 %v2368
    %v2515 = vunpack.c.l.b16 %v2369
    %v2516 = vunpack.c.l.b16 %v2370
    %v2517 = vunpack.c.l.b16 %v2371
    %v2518 = vunpack.c.l.b16 %v2372
    %v2519 = vunpack.c.l.b16 %v2373
    %v2520 = vunpack.c.l.b16 %v2374
    %v2521 = vunpack.c.l.b16 %v2375
    %v2522 = vunpack.c.l.b16 %v2376
    %v2523 = vunpack.c.l.b16 %v2377
    %v2524 = vunpack.c.l.b16 %v2378
    %v2525 = vunpack.c.l.b16 %v2379
    %v2526 = vunpack.c.l.b16 %v2380
    %v2527 = vunpack.c.l.b16 %v2381
    %v2528 = vpack.c.b16 %v2513, %v2512
    %v2529 = vpack.c.b16 %v2515, %v2514
    %v2530 = vpack.c.b16 %v2517, %v2516
    %v2531 = vpack.c.b16 %v2519, %v2518
    %v2532 = vpack.c.b16 %v2521, %v2520
    %v2533 = vpack.c.b16 %v2523, %v2522
    %v2534 = vpack.c.b16 %v2525, %v2524
    %v2535 = vpack.c.b16 %v2527, %v2526
    %2544 = vmatprep.subr.bf16.mxu0 0
    %2545 = vmatpush1.bf16.msra.mxu0 %v2535
    %2546 = vmatprep.subr.bf16.mxu0 0
    %2547 = vmatpush1.bf16.msra.mxu0 %v2534
    %2548 = vmatprep.subr.bf16.mxu0 0
    %2549 = vmatpush1.bf16.msra.mxu0 %v2533
    %2550 = vmatprep.subr.bf16.mxu0 0
    %2551 = vmatpush1.bf16.msra.mxu0 %v2532
    %2552 = vmatprep.subr.bf16.mxu0 0
    %2553 = vmatpush1.bf16.msra.mxu0 %v2531
    %2554 = vmatprep.subr.bf16.mxu0 0
    %2555 = vmatpush1.bf16.msra.mxu0 %v2530
    %2556 = vmatprep.subr.bf16.mxu0 0
    %2557 = vmatpush1.bf16.msra.mxu0 %v2529
    %2558 = vmatprep.subr.bf16.mxu0 0
    %2559 = vmatpush1.bf16.msra.mxu0 %v2528
    %2560 = vmatprep.subr.bf16.mxu0 0
    %2561 = vmatpush2.bf16.msra.mxu0 0
    %2562 = vmatprep.subr.bf16.mxu0 0
    %2563 = vmatpush2.bf16.msra.mxu0 0
    %2564 = vmatprep.subr.bf16.mxu0 0
    %2565 = vmatpush2.bf16.msra.mxu0 0
    %2566 = vmatprep.subr.bf16.mxu0 0
    %2567 = vmatpush2.bf16.msra.mxu0 0
    %2568 = vmatprep.subr.bf16.mxu0 0
    %2569 = vmatpush2.bf16.msra.mxu0 0
    %2570 = vmatprep.subr.bf16.mxu0 0
    %2571 = vmatpush2.bf16.msra.mxu0 0
    %2572 = vmatprep.subr.bf16.mxu0 0
    %2573 = vmatpush2.bf16.msra.mxu0 0
    %2574 = vmatprep.subr.bf16.mxu0 0
    %2575 = vmatpush2.bf16.msra.mxu0 0
    %2576 = vmatprep.mubr.bf16.mxu0 0
    %2577 = vmatmul.mubr.bf16.gmra.mxu0 %v2363
    %v2578 = vpop.f32.mrf.mxu0
    %v2579 = vadd.f32 %v2490, %v2578
    %v2580 = vpop.f32.mrf.mxu0
    %v2581 = vpop.f32.mrf.mxu0
    %v2582 = vadd.f32 %v2493, %v2581
    %v2583 = vpop.f32.mrf.mxu0
    %2584 = vdwg.mxu0
    %v2585 = vld [vmem:[%s2 + $0x80] sm:$0xf]
    %v2586 = vld [vmem:[%s2 + $0x84] sm:$0xf]
    %v2587 = vld [vmem:[%s2 + $0x88] sm:$0xf]
    %v2588 = vld [vmem:[%s2 + $0x8c] sm:$0xf]
    %v2589 = vld [vmem:[%s2 + $0x90] sm:$0xf]
    %v2590 = vld [vmem:[%s2 + $0x94] sm:$0xf]
    %v2591 = vld [vmem:[%s2 + $0x98] sm:$0xf]
    %v2592 = vld [vmem:[%s2 + $0x9c] sm:$0xf]
    %v2593 = vld [vmem:[%s2 + $0xa0] sm:$0xf]
    %v2594 = vld [vmem:[%s2 + $0xa4] sm:$0xf]
    %v2595 = vld [vmem:[%s2 + $0xa8] sm:$0xf]
    %v2596 = vld [vmem:[%s2 + $0xac] sm:$0xf]
    %v2597 = vld [vmem:[%s2 + $0xb0] sm:$0xf]
    %v2598 = vld [vmem:[%s2 + $0xb4] sm:$0xf]
    %v2599 = vld [vmem:[%s2 + $0xb8] sm:$0xf]
    %v2600 = vld [vmem:[%s2 + $0xbc] sm:$0xf]
    %v2602 = vrot.slane %v2363, 1
    %v2603 = vsel %vm326, %v2602, %v1619
    %v2621 = vunpack.c.l.b16 %v2585
    %v2622 = vunpack.c.l.b16 %v2586
    %v2623 = vunpack.c.l.b16 %v2587
    %v2624 = vunpack.c.l.b16 %v2588
    %v2625 = vunpack.c.l.b16 %v2589
    %v2626 = vunpack.c.l.b16 %v2590
    %v2627 = vunpack.c.l.b16 %v2591
    %v2628 = vunpack.c.l.b16 %v2592
    %v2629 = vunpack.c.l.b16 %v2593
    %v2630 = vunpack.c.l.b16 %v2594
    %v2631 = vunpack.c.l.b16 %v2595
    %v2632 = vunpack.c.l.b16 %v2596
    %v2633 = vunpack.c.l.b16 %v2597
    %v2634 = vunpack.c.l.b16 %v2598
    %v2635 = vunpack.c.l.b16 %v2599
    %v2636 = vunpack.c.l.b16 %v2600
    %v2637 = vpack.c.b16 %v2622, %v2621
    %v2638 = vpack.c.b16 %v2624, %v2623
    %v2639 = vpack.c.b16 %v2626, %v2625
    %v2640 = vpack.c.b16 %v2628, %v2627
    %v2641 = vpack.c.b16 %v2630, %v2629
    %v2642 = vpack.c.b16 %v2632, %v2631
    %v2643 = vpack.c.b16 %v2634, %v2633
    %v2644 = vpack.c.b16 %v2636, %v2635
    %2653 = vmatprep.subr.bf16.mxu0 0
    %2654 = vmatpush1.bf16.msra.mxu0 %v2644
    %2655 = vmatprep.subr.bf16.mxu0 0
    %2656 = vmatpush1.bf16.msra.mxu0 %v2643
    %2657 = vmatprep.subr.bf16.mxu0 0
    %2658 = vmatpush1.bf16.msra.mxu0 %v2642
    %2659 = vmatprep.subr.bf16.mxu0 0
    %2660 = vmatpush1.bf16.msra.mxu0 %v2641
    %2661 = vmatprep.subr.bf16.mxu0 0
    %2662 = vmatpush1.bf16.msra.mxu0 %v2640
    %2663 = vmatprep.subr.bf16.mxu0 0
    %2664 = vmatpush1.bf16.msra.mxu0 %v2639
    %2665 = vmatprep.subr.bf16.mxu0 0
    %2666 = vmatpush1.bf16.msra.mxu0 %v2638
    %2667 = vmatprep.subr.bf16.mxu0 0
    %2668 = vmatpush1.bf16.msra.mxu0 %v2637
    %2669 = vmatprep.subr.bf16.mxu0 0
    %2670 = vmatpush2.bf16.msra.mxu0 0
    %2671 = vmatprep.subr.bf16.mxu0 0
    %2672 = vmatpush2.bf16.msra.mxu0 0
    %2673 = vmatprep.subr.bf16.mxu0 0
    %2674 = vmatpush2.bf16.msra.mxu0 0
    %2675 = vmatprep.subr.bf16.mxu0 0
    %2676 = vmatpush2.bf16.msra.mxu0 0
    %2677 = vmatprep.subr.bf16.mxu0 0
    %2678 = vmatpush2.bf16.msra.mxu0 0
    %2679 = vmatprep.subr.bf16.mxu0 0
    %2680 = vmatpush2.bf16.msra.mxu0 0
    %2681 = vmatprep.subr.bf16.mxu0 0
    %2682 = vmatpush2.bf16.msra.mxu0 0
    %2683 = vmatprep.subr.bf16.mxu0 0
    %2684 = vmatpush2.bf16.msra.mxu0 0
    %2685 = vmatprep.mubr.bf16.mxu0 0
    %2686 = vmatmul.mubr.bf16.gmra.mxu0 %v2603
    %v2687 = vpop.f32.mrf.mxu0
    %v2688 = vadd.f32 0.0, %v2687
    %v2689 = vpop.f32.mrf.mxu0
    %v2690 = vpop.f32.mrf.mxu0
    %v2691 = vadd.f32 0.0, %v2690
    %v2692 = vpop.f32.mrf.mxu0
    %2693 = vdwg.mxu0
    %v2694 = vadd.f32 %v2579, %v2688
    %v2695 = vadd.f32 %v2582, %v2691
    %v2696 = vld [vmem:[%s2 + $0xc0] sm:$0xf]
    %v2697 = vld [vmem:[%s2 + $0xc4] sm:$0xf]
    %v2698 = vld [vmem:[%s2 + $0xc8] sm:$0xf]
    %v2699 = vld [vmem:[%s2 + $0xcc] sm:$0xf]
    %v2700 = vld [vmem:[%s2 + $0xd0] sm:$0xf]
    %v2701 = vld [vmem:[%s2 + $0xd4] sm:$0xf]
    %v2702 = vld [vmem:[%s2 + $0xd8] sm:$0xf]
    %v2703 = vld [vmem:[%s2 + $0xdc] sm:$0xf]
    %v2704 = vld [vmem:[%s2 + $0xe0] sm:$0xf]
    %v2705 = vld [vmem:[%s2 + $0xe4] sm:$0xf]
    %v2706 = vld [vmem:[%s2 + $0xe8] sm:$0xf]
    %v2707 = vld [vmem:[%s2 + $0xec] sm:$0xf]
    %v2708 = vld [vmem:[%s2 + $0xf0] sm:$0xf]
    %v2709 = vld [vmem:[%s2 + $0xf4] sm:$0xf]
    %v2710 = vld [vmem:[%s2 + $0xf8] sm:$0xf]
    %v2711 = vld [vmem:[%s2 + $0xfc] sm:$0xf]
    %v2712 = vrot.slane %v2399, 1
    %v2713 = vrot.slane %v2401, 2
    %v2714 = vor.u32 %v2712, %v2713
    %v2715 = vsel %vm465, %v2714, %v1791
    %v2733 = vunpack.c.l.b16 %v2696
    %v2734 = vunpack.c.l.b16 %v2697
    %v2735 = vunpack.c.l.b16 %v2698
    %v2736 = vunpack.c.l.b16 %v2699
    %v2737 = vunpack.c.l.b16 %v2700
    %v2738 = vunpack.c.l.b16 %v2701
    %v2739 = vunpack.c.l.b16 %v2702
    %v2740 = vunpack.c.l.b16 %v2703
    %v2741 = vunpack.c.l.b16 %v2704
    %v2742 = vunpack.c.l.b16 %v2705
    %v2743 = vunpack.c.l.b16 %v2706
    %v2744 = vunpack.c.l.b16 %v2707
    %v2745 = vunpack.c.l.b16 %v2708
    %v2746 = vunpack.c.l.b16 %v2709
    %v2747 = vunpack.c.l.b16 %v2710
    %v2748 = vunpack.c.l.b16 %v2711
    %v2749 = vpack.c.b16 %v2734, %v2733
    %v2750 = vpack.c.b16 %v2736, %v2735
    %v2751 = vpack.c.b16 %v2738, %v2737
    %v2752 = vpack.c.b16 %v2740, %v2739
    %v2753 = vpack.c.b16 %v2742, %v2741
    %v2754 = vpack.c.b16 %v2744, %v2743
    %v2755 = vpack.c.b16 %v2746, %v2745
    %v2756 = vpack.c.b16 %v2748, %v2747
    %2765 = vmatprep.subr.bf16.mxu0 0
    %2766 = vmatpush1.bf16.msra.mxu0 %v2756
    %2767 = vmatprep.subr.bf16.mxu0 0
    %2768 = vmatpush1.bf16.msra.mxu0 %v2755
    %2769 = vmatprep.subr.bf16.mxu0 0
    %2770 = vmatpush1.bf16.msra.mxu0 %v2754
    %2771 = vmatprep.subr.bf16.mxu0 0
    %2772 = vmatpush1.bf16.msra.mxu0 %v2753
    %2773 = vmatprep.subr.bf16.mxu0 0
    %2774 = vmatpush1.bf16.msra.mxu0 %v2752
    %2775 = vmatprep.subr.bf16.mxu0 0
    %2776 = vmatpush1.bf16.msra.mxu0 %v2751
    %2777 = vmatprep.subr.bf16.mxu0 0
    %2778 = vmatpush1.bf16.msra.mxu0 %v2750
    %2779 = vmatprep.subr.bf16.mxu0 0
    %2780 = vmatpush1.bf16.msra.mxu0 %v2749
    %2781 = vmatprep.subr.bf16.mxu0 0
    %2782 = vmatpush2.bf16.msra.mxu0 0
    %2783 = vmatprep.subr.bf16.mxu0 0
    %2784 = vmatpush2.bf16.msra.mxu0 0
    %2785 = vmatprep.subr.bf16.mxu0 0
    %2786 = vmatpush2.bf16.msra.mxu0 0
    %2787 = vmatprep.subr.bf16.mxu0 0
    %2788 = vmatpush2.bf16.msra.mxu0 0
    %2789 = vmatprep.subr.bf16.mxu0 0
    %2790 = vmatpush2.bf16.msra.mxu0 0
    %2791 = vmatprep.subr.bf16.mxu0 0
    %2792 = vmatpush2.bf16.msra.mxu0 0
    %2793 = vmatprep.subr.bf16.mxu0 0
    %2794 = vmatpush2.bf16.msra.mxu0 0
    %2795 = vmatprep.subr.bf16.mxu0 0
    %2796 = vmatpush2.bf16.msra.mxu0 0
    %2797 = vmatprep.mubr.bf16.mxu0 0
    %2798 = vmatmul.mubr.bf16.gmra.mxu0 %v2715
    %v2799 = vpop.f32.mrf.mxu0
    %v2800 = vadd.f32 0.0, %v2799
    %v2801 = vpop.f32.mrf.mxu0
    %v2802 = vpop.f32.mrf.mxu0
    %v2803 = vadd.f32 0.0, %v2802
    %v2804 = vpop.f32.mrf.mxu0
    %2805 = vdwg.mxu0
    %v2806 = vadd.f32 %v2694, %v2800
    %v2807 = vadd.f32 %v2695, %v2803
    %v2808 = vlaneseq
    %v2809 = vshrl.u32 %v2808, 7
    %v2810 = vsub.s32 0, %v2809
    %v2811 = vrot.slane %v2365, %v2810
    %v2812 = vadd.f32 %v2806, %v2811
    %v2813 = vadd.f32 %v2807, %v2811
    %v2814 = vmax.f32 %v2812, 0.0
    %v2815 = vmax.f32 %v2813, 0.0
    %v2816 = vpack.c.bf16 %v2815, %v2814
    %v2817 = vld [vmem:[%s2 + $0x100] sm:$0xf]
    %v2818 = vld [vmem:[%s2 + $0x104] sm:$0xf]
    %v2819 = vld [vmem:[%s2 + $0x108] sm:$0xf]
    %v2820 = vld [vmem:[%s2 + $0x10c] sm:$0xf]
    %v2821 = vld [vmem:[%s2 + $0x110] sm:$0xf]
    %v2822 = vld [vmem:[%s2 + $0x114] sm:$0xf]
    %v2823 = vld [vmem:[%s2 + $0x118] sm:$0xf]
    %v2824 = vld [vmem:[%s2 + $0x11c] sm:$0xf]
    %v2825 = vld [vmem:[%s2 + $0x120] sm:$0xf]
    %v2826 = vld [vmem:[%s2 + $0x124] sm:$0xf]
    %v2827 = vld [vmem:[%s2 + $0x128] sm:$0xf]
    %v2828 = vld [vmem:[%s2 + $0x12c] sm:$0xf]
    %v2829 = vld [vmem:[%s2 + $0x130] sm:$0xf]
    %v2830 = vld [vmem:[%s2 + $0x134] sm:$0xf]
    %v2831 = vld [vmem:[%s2 + $0x138] sm:$0xf]
    %v2832 = vld [vmem:[%s2 + $0x13c] sm:$0xf]
    %v2833 = vlaneseq
    %v2834 = vshrl.u32 %v2833, 7
    %v2835 = vsub.s32 1, %v2834
    %v2836 = vrot.slane %v2365, %v2835
    %v2853 = vunpack.c.l.b16 %v2817
    %v2854 = vunpack.c.l.b16 %v2818
    %v2855 = vunpack.c.l.b16 %v2819
    %v2856 = vunpack.c.l.b16 %v2820
    %v2857 = vunpack.c.l.b16 %v2821
    %v2858 = vunpack.c.l.b16 %v2822
    %v2859 = vunpack.c.l.b16 %v2823
    %v2860 = vunpack.c.l.b16 %v2824
    %v2861 = vunpack.c.l.b16 %v2825
    %v2862 = vunpack.c.l.b16 %v2826
    %v2863 = vunpack.c.l.b16 %v2827
    %v2864 = vunpack.c.l.b16 %v2828
    %v2865 = vunpack.c.l.b16 %v2829
    %v2866 = vunpack.c.l.b16 %v2830
    %v2867 = vunpack.c.l.b16 %v2831
    %v2868 = vunpack.c.l.b16 %v2832
    %v2869 = vpack.c.b16 %v2854, %v2853
    %v2870 = vpack.c.b16 %v2856, %v2855
    %v2871 = vpack.c.b16 %v2858, %v2857
    %v2872 = vpack.c.b16 %v2860, %v2859
    %v2873 = vpack.c.b16 %v2862, %v2861
    %v2874 = vpack.c.b16 %v2864, %v2863
    %v2875 = vpack.c.b16 %v2866, %v2865
    %v2876 = vpack.c.b16 %v2868, %v2867
    %2885 = vmatprep.subr.bf16.mxu0 0
    %2886 = vmatpush1.bf16.msra.mxu0 %v2876
    %2887 = vmatprep.subr.bf16.mxu0 0
    %2888 = vmatpush1.bf16.msra.mxu0 %v2875
    %2889 = vmatprep.subr.bf16.mxu0 0
    %2890 = vmatpush1.bf16.msra.mxu0 %v2874
    %2891 = vmatprep.subr.bf16.mxu0 0
    %2892 = vmatpush1.bf16.msra.mxu0 %v2873
    %2893 = vmatprep.subr.bf16.mxu0 0
    %2894 = vmatpush1.bf16.msra.mxu0 %v2872
    %2895 = vmatprep.subr.bf16.mxu0 0
    %2896 = vmatpush1.bf16.msra.mxu0 %v2871
    %2897 = vmatprep.subr.bf16.mxu0 0
    %2898 = vmatpush1.bf16.msra.mxu0 %v2870
    %2899 = vmatprep.subr.bf16.mxu0 0
    %2900 = vmatpush1.bf16.msra.mxu0 %v2869
    %2901 = vmatprep.subr.bf16.mxu0 0
    %2902 = vmatpush2.bf16.msra.mxu0 0
    %2903 = vmatprep.subr.bf16.mxu0 0
    %2904 = vmatpush2.bf16.msra.mxu0 0
    %2905 = vmatprep.subr.bf16.mxu0 0
    %2906 = vmatpush2.bf16.msra.mxu0 0
    %2907 = vmatprep.subr.bf16.mxu0 0
    %2908 = vmatpush2.bf16.msra.mxu0 0
    %2909 = vmatprep.subr.bf16.mxu0 0
    %2910 = vmatpush2.bf16.msra.mxu0 0
    %2911 = vmatprep.subr.bf16.mxu0 0
    %2912 = vmatpush2.bf16.msra.mxu0 0
    %2913 = vmatprep.subr.bf16.mxu0 0
    %2914 = vmatpush2.bf16.msra.mxu0 0
    %2915 = vmatprep.subr.bf16.mxu0 0
    %2916 = vmatpush2.bf16.msra.mxu0 0
    %2917 = vmatprep.mubr.bf16.mxu0 0
    %2918 = vmatmul.mubr.bf16.gmra.mxu0 %v2816
    %v2919 = vpop.f32.mrf.mxu0
    %v2920 = vadd.f32 %v2836, %v2919
    %v2921 = vpop.f32.mrf.mxu0
    %v2922 = vpop.f32.mrf.mxu0
    %v2923 = vadd.f32 %v2836, %v2922
    %v2924 = vpop.f32.mrf.mxu0
    %2925 = vdwg.mxu0
    %v2926 = vmax.f32 %v2920, 0.0
    %v2927 = vmax.f32 %v2923, 0.0
    %v2928 = vpack.c.bf16 %v2927, %v2926
    %v2929 = vld [vmem:[%s2 + $0x140] sm:$0xf]
    %v2930 = vld [vmem:[%s2 + $0x144] sm:$0xf]
    %v2931 = vld [vmem:[%s2 + $0x148] sm:$0xf]
    %v2932 = vld [vmem:[%s2 + $0x14c] sm:$0xf]
    %v2933 = vld [vmem:[%s2 + $0x150] sm:$0xf]
    %v2934 = vld [vmem:[%s2 + $0x154] sm:$0xf]
    %v2935 = vld [vmem:[%s2 + $0x158] sm:$0xf]
    %v2936 = vld [vmem:[%s2 + $0x15c] sm:$0xf]
    %v2937 = vld [vmem:[%s2 + $0x160] sm:$0xf]
    %v2938 = vld [vmem:[%s2 + $0x164] sm:$0xf]
    %v2939 = vld [vmem:[%s2 + $0x168] sm:$0xf]
    %v2940 = vld [vmem:[%s2 + $0x16c] sm:$0xf]
    %v2941 = vld [vmem:[%s2 + $0x170] sm:$0xf]
    %v2942 = vld [vmem:[%s2 + $0x174] sm:$0xf]
    %v2943 = vld [vmem:[%s2 + $0x178] sm:$0xf]
    %v2944 = vld [vmem:[%s2 + $0x17c] sm:$0xf]
    %v2945 = vlaneseq
    %v2946 = vshrl.u32 %v2945, 7
    %v2947 = vsub.s32 2, %v2946
    %v2948 = vrot.slane %v2365, %v2947
    %v2965 = vunpack.c.l.b16 %v2929
    %v2966 = vunpack.c.l.b16 %v2930
    %v2967 = vunpack.c.l.b16 %v2931
    %v2968 = vunpack.c.l.b16 %v2932
    %v2969 = vunpack.c.l.b16 %v2933
    %v2970 = vunpack.c.l.b16 %v2934
    %v2971 = vunpack.c.l.b16 %v2935
    %v2972 = vunpack.c.l.b16 %v2936
    %v2973 = vunpack.c.l.b16 %v2937
    %v2974 = vunpack.c.l.b16 %v2938
    %v2975 = vunpack.c.l.b16 %v2939
    %v2976 = vunpack.c.l.b16 %v2940
    %v2977 = vunpack.c.l.b16 %v2941
    %v2978 = vunpack.c.l.b16 %v2942
    %v2979 = vunpack.c.l.b16 %v2943
    %v2980 = vunpack.c.l.b16 %v2944
    %v2981 = vpack.c.b16 %v2966, %v2965
    %v2982 = vpack.c.b16 %v2968, %v2967
    %v2983 = vpack.c.b16 %v2970, %v2969
    %v2984 = vpack.c.b16 %v2972, %v2971
    %v2985 = vpack.c.b16 %v2974, %v2973
    %v2986 = vpack.c.b16 %v2976, %v2975
    %v2987 = vpack.c.b16 %v2978, %v2977
    %v2988 = vpack.c.b16 %v2980, %v2979
    %2997 = vmatprep.subr.bf16.mxu0 0
    %2998 = vmatpush1.bf16.msra.mxu0 %v2988
    %2999 = vmatprep.subr.bf16.mxu0 0
    %3000 = vmatpush1.bf16.msra.mxu0 %v2987
    %3001 = vmatprep.subr.bf16.mxu0 0
    %3002 = vmatpush1.bf16.msra.mxu0 %v2986
    %3003 = vmatprep.subr.bf16.mxu0 0
    %3004 = vmatpush1.bf16.msra.mxu0 %v2985
    %3005 = vmatprep.subr.bf16.mxu0 0
    %3006 = vmatpush1.bf16.msra.mxu0 %v2984
    %3007 = vmatprep.subr.bf16.mxu0 0
    %3008 = vmatpush1.bf16.msra.mxu0 %v2983
    %3009 = vmatprep.subr.bf16.mxu0 0
    %3010 = vmatpush1.bf16.msra.mxu0 %v2982
    %3011 = vmatprep.subr.bf16.mxu0 0
    %3012 = vmatpush1.bf16.msra.mxu0 %v2981
    %3013 = vmatprep.subr.bf16.mxu0 0
    %3014 = vmatpush2.bf16.msra.mxu0 0
    %3015 = vmatprep.subr.bf16.mxu0 0
    %3016 = vmatpush2.bf16.msra.mxu0 0
    %3017 = vmatprep.subr.bf16.mxu0 0
    %3018 = vmatpush2.bf16.msra.mxu0 0
    %3019 = vmatprep.subr.bf16.mxu0 0
    %3020 = vmatpush2.bf16.msra.mxu0 0
    %3021 = vmatprep.subr.bf16.mxu0 0
    %3022 = vmatpush2.bf16.msra.mxu0 0
    %3023 = vmatprep.subr.bf16.mxu0 0
    %3024 = vmatpush2.bf16.msra.mxu0 0
    %3025 = vmatprep.subr.bf16.mxu0 0
    %3026 = vmatpush2.bf16.msra.mxu0 0
    %3027 = vmatprep.subr.bf16.mxu0 0
    %3028 = vmatpush2.bf16.msra.mxu0 0
    %3029 = vmatprep.mubr.bf16.mxu0 0
    %3030 = vmatmul.mubr.bf16.gmra.mxu0 %v2928
    %v3031 = vpop.f32.mrf.mxu0
    %v3032 = vadd.f32 %v2948, %v3031
    %v3033 = vpop.f32.mrf.mxu0
    %v3034 = vpop.f32.mrf.mxu0
    %v3035 = vadd.f32 %v2948, %v3034
    %v3036 = vpop.f32.mrf.mxu0
    %3037 = vdwg.mxu0
    %3038 = vst [vmem:[%s3] sm:$0xff] %v3032
    %3039 = vst [vmem:[%s3 + $0x8] sm:$0xff] %v3035
    // Predicated region
    $region18: #{convnet_forward.1} parent=1 // pred_check
      _
    $region19: #{convnet_forward.1} parent=1 // pred_check_branch
      %3041 = sbr.rel (0) target = $region21
    $region20: #{convnet_forward.1} parent=1 // pred_region
      _
    $region21: #{convnet_forward.1} parent=1 // pred_fallthru
      _
    // Predicated region
    $region22: #{convnet_forward.1} parent=1 // pred_check
      _
    $region23: #{convnet_forward.1} parent=1 // pred_check_branch
      %3043 = sbr.rel (0) target = $region25
    $region24: #{convnet_forward.1} parent=1 // pred_region
      _
    $region25: #{convnet_forward.1} parent=1 // pred_fallthru
      _
    %3044 = vsyncpa [#allocation3], 1

</llo_original>
